<compile_context>
chip_gen: v7x
topology: tpu7x:2x2x1
jax: 0.10.0
libtpu: 0.0.40
codegen_flags: <defaults>
</compile_context>

<pallas_src>
import jax
import jax.numpy as jnp
from jax.experimental import pallas as pl
from jax.experimental.pallas import tpu as pltpu


def lstm_kernel(x_ref,      # [B, T, 1] f32   batch-first input (PyTorch layout)
                wx_ref,     # [1, 8H]   f32   [Wih0 row (i,f,o,2g) | zeros(4H)]
                brow_ref,   # [1, 8H]   f32   [b_ih0+b_hh0 | b_ih1+b_hh1]
                wcomb_ref,  # [2H, 8H]  bf16  [[Whh0, Wih1], [0, Whh1]]
                wfc_ref,    # [H, C]    bf16
                bfc_ref,    # [1, C]    f32
                out_ref,    # [B, C]    f32
                hc_ref):    # [B, 2H]   f32   scratch: fused-matmul LHS [h0 | h1]
    B, T, _ = x_ref.shape
    G2 = wx_ref.shape[1]          # 8H
    G = G2 // 2                   # 4H
    H = G // 4

    f32 = jnp.float32
    bf16 = jnp.bfloat16

    # ---- hoisted, recurrence-independent work --------------------------------
    wcomb = wcomb_ref[...]                                   # [2H, 8H] bf16
    wfc = wfc_ref[...]                                       # [H, C]   bf16

    # pre_sched[:, t, :G] = x(t) * Wih0 + b0   (layer-0 pre-gates of step t)
    # pre_sched[:, t, G:] = b1                 (layer-1 bias, step-independent)
    pre_sched = (x_ref[...] * wx_ref[...].reshape(1, 1, G2)
                 + brow_ref[...].reshape(1, 1, G2))          # [B, T, 8H] f32
    pre_rows = [pre_sched[:, t, :] for t in range(T)]        # static slices

    def lstm_gates(act, off, c_prev):
        # `act` holds sigmoid(pre-gates); gate order (i, f, o, g) where the g
        # columns were pre-scaled by 2, so 2*sigmoid(2z) - 1 == tanh(z).
        i = act[:, off + 0 * H: off + 1 * H]
        f = act[:, off + 1 * H: off + 2 * H]
        o = act[:, off + 2 * H: off + 3 * H]
        g = 2.0 * act[:, off + 3 * H: off + 4 * H] - 1.0
        c_new = f * c_prev + i * g
        h_new = o * jnp.tanh(c_new)
        return h_new, c_new

    zeros = jnp.zeros((B, H), f32)

    # ---- prologue: layer-0, step 0 (h0(-1) = c0(-1) = 0 -> no matmul) --------
    act0 = jax.nn.sigmoid(pre_rows[0][:, :G])
    h0, c0 = lstm_gates(act0, 0, zeros)
    hc_ref[:, 0:H] = h0                                      # h0(0)
    hc_ref[:, H:2 * H] = zeros                               # h1(-1) = 0
    c1 = zeros
    h1 = zeros

    # ---- wavefront loop: iteration k emits layer-1(step k) and layer-0(step k+1)
    for k in range(T):
        hc = hc_ref[...]                                     # [h0(k) | h1(k-1)]
        fused = jnp.dot(hc.astype(bf16), wcomb,
                        preferred_element_type=f32)          # [B, 8H]
        if k < T - 1:
            # one wide sigmoid covers both layers' gates for this iteration
            act = jax.nn.sigmoid(fused + pre_rows[k + 1])
            h1, c1 = lstm_gates(act, G, c1)                  # layer 1, step k
            hc_ref[:, H:2 * H] = h1
            h0, c0 = lstm_gates(act, 0, c0)                  # layer 0, step k+1
            hc_ref[:, 0:H] = h0
        else:
            # last iteration: only layer 1 feeds the classifier head
            act = jax.nn.sigmoid(fused[:, G:] + pre_rows[0][:, G:])
            h1, c1 = lstm_gates(act, 0, c1)

    # ---- classifier head on h1(T-1) -------------------------------------------
    # TODO(synk): C=2 makes this one masked (non lane-dense) store; pad wfc/out
    # to 128 lanes only if the epilogue ever shows up in a bundle dump.
    out = jnp.dot(h1.astype(bf16), wfc, preferred_element_type=f32) + bfc_ref[...]
    out_ref[...] = out.astype(out_ref.dtype)


def _reorder_and_scale_gates(w, H):
    """PyTorch gate order (i, f, g, o) -> (i, f, o, g); scale the tanh-gate (g)
    block by 2 so the kernel can evaluate tanh(z) as 2*sigmoid(2z) - 1."""
    return jnp.concatenate(
        [w[..., 0:2 * H], w[..., 3 * H:4 * H], 2.0 * w[..., 2 * H:3 * H]], axis=-1)


def prepare_kernel_params(params):
    """PyTorch-convention params -> kernel layout (done once, offline-able).

      wx_row   [1, 8H]  = [Wih0 row | 0]
      bias_row [1, 8H]  = [b_ih0 + b_hh0 | b_ih1 + b_hh1]
      wcomb    [2H, 8H] = [[Whh0, Wih1], [0, Whh1]]   (bf16 MXU operand)
      wfc      [H, C]                                  (bf16 MXU operand)
    all with gate order (i, f, o, g) and the g block scaled by 2.
    """
    H = params["whh0"].shape[0]
    r = lambda w: _reorder_and_scale_gates(w, H)
    wih0, whh0, b0 = r(params["wih0"]), r(params["whh0"]), r(params["b0"])
    wih1, whh1, b1 = r(params["wih1"]), r(params["whh1"]), r(params["b1"])

    wx_row = jnp.concatenate([wih0, jnp.zeros_like(wih0)], axis=-1)        # [1, 8H]
    bias_row = jnp.concatenate([b0, b1], axis=-1)                          # [1, 8H]
    wcomb = jnp.concatenate(
        [jnp.concatenate([whh0, wih1], axis=-1),
         jnp.concatenate([jnp.zeros_like(whh1), whh1], axis=-1)],
        axis=0).astype(jnp.bfloat16)                                       # [2H, 8H]
    return dict(wx_row=wx_row, bias_row=bias_row, wcomb=wcomb,
                wfc=params["wfc"].astype(jnp.bfloat16), bfc=params["bfc"])


def tabular_lstm_forward(x, params):
    """x: [B, T, 1] float32 (PyTorch batch_first). Inference forward pass."""
    B, T, _ = x.shape
    kp = prepare_kernel_params(params)
    H, C = kp["wfc"].shape

    vmem = pl.BlockSpec(memory_space=pltpu.MemorySpace.VMEM)
    call = pl.pallas_call(
        lstm_kernel,
        out_shape=jax.ShapeDtypeStruct((B, C), jnp.float32),
        in_specs=[vmem] * 6,
        out_specs=vmem,
        scratch_shapes=[pltpu.VMEM((B, 2 * H), jnp.float32)],
    )
    # NOTE: for real serving batches, (a) grow/pad B to a multiple of 8 so the
    # [B, .] tiles fill vreg sublanes and the per-call launch + param-DMA cost
    # amortizes, and (b) add a batch grid (grid=(cdiv(B, Bt),),
    # dimension_semantics=("parallel",)) so v7x's two TensorCores split the
    # batch.  At B=2 a single ungridded call is optimal; total VMEM use < 1 MiB.
    return call(x, kp["wx_row"], kp["bias_row"], kp["wcomb"], kp["wfc"], kp["bfc"])


def make_params(key, input_size=1, hidden_size=64, num_classes=2):
    """Deterministic init mirroring PyTorch shapes (weights pre-transposed to
    [in_features, 4H], gate order (i, f, g, o) as in PyTorch)."""
    H = hidden_size
    bound = 1.0 / jnp.sqrt(jnp.float32(H))
    keys = jax.random.split(key, 10)

    def u(k, shape):
        return jax.random.uniform(k, shape, jnp.float32, -bound, bound)

    return dict(
        wih0=u(keys[0], (input_size, 4 * H)),
        whh0=u(keys[1], (H, 4 * H)),
        b0=u(keys[2], (1, 4 * H)) + u(keys[3], (1, 4 * H)),   # b_ih0 + b_hh0
        wih1=u(keys[4], (H, 4 * H)),
        whh1=u(keys[5], (H, 4 * H)),
        b1=u(keys[6], (1, 4 * H)) + u(keys[7], (1, 4 * H)),   # b_ih1 + b_hh1
        wfc=u(keys[8], (H, num_classes)),
        bfc=u(keys[9], (1, num_classes)),
    )


def reference_forward(x, params):
    """Canonical per-step 2-layer LSTM + FC (PyTorch gate order, real tanh).

    Matmul operands are rounded to bf16 with f32 accumulation — exactly what
    the kernel's MXU path (and XLA's default f32 matmul precision on TPU)
    does — so this check isolates the kernel's structural transforms.  Versus
    a strict fp32 PyTorch LSTM the outputs differ at the ~1e-3 level purely
    from bf16 MXU inputs.
    """
    H = params["whh0"].shape[0]
    mm = lambda a, w: jnp.dot(a.astype(jnp.bfloat16), w.astype(jnp.bfloat16),
                              preferred_element_type=jnp.float32)

    def gates(g, c):
        i = jax.nn.sigmoid(g[:, 0 * H:1 * H])
        f = jax.nn.sigmoid(g[:, 1 * H:2 * H])
        gg = jnp.tanh(g[:, 2 * H:3 * H])
        o = jax.nn.sigmoid(g[:, 3 * H:4 * H])
        c_new = f * c + i * gg
        return o * jnp.tanh(c_new), c_new

    B, T, _ = x.shape
    h0 = c0 = h1 = c1 = jnp.zeros((B, H), jnp.float32)
    for t in range(T):
        x_t = x[:, t, :]                                               # [B, 1]
        g0 = x_t * params["wih0"] + params["b0"] + mm(h0, params["whh0"])
        h0, c0 = gates(g0, c0)
        g1 = mm(h0, params["wih1"]) + mm(h1, params["whh1"]) + params["b1"]
        h1, c1 = gates(g1, c1)
    return mm(h1, params["wfc"]) + params["bfc"]


if __name__ == "__main__":
    key = jax.random.PRNGKey(0)
    k_x, k_p = jax.random.split(key)

    B, T, I = 2, 8, 1          # batch=2, seq=8, input_size=1 (as in the module)
    x = jax.random.normal(k_x, (B, T, I), jnp.float32)
    params = make_params(k_p, input_size=I, hidden_size=64, num_classes=2)

    out = jax.block_until_ready(tabular_lstm_forward(x, params))
    ref = reference_forward(x, params)

    assert out.shape == (B, 2)
    assert bool(jnp.all(jnp.isfinite(out)))
    assert jnp.allclose(out, ref, atol=1e-4, rtol=1e-4), (out, ref)

    print("KERNEL_OK")
</pallas_src>

<mosaic_0001>
module attributes {stable_mosaic.version = 11 : i64} {
  func.func @lstm_kernel(%arg0: memref<2x8x1xf32, #tpu.memory_space<vmem>>, %arg1: memref<1x512xf32, #tpu.memory_space<vmem>>, %arg2: memref<1x512xf32, #tpu.memory_space<vmem>>, %arg3: memref<128x512xbf16, #tpu.memory_space<vmem>>, %arg4: memref<64x2xbf16, #tpu.memory_space<vmem>>, %arg5: memref<1x2xf32, #tpu.memory_space<vmem>>, %arg6: memref<2x2xf32, #tpu.memory_space<vmem>>, %arg7: memref<2x128xf32, #tpu.memory_space<vmem>>) attributes {dimension_semantics = [], scalar_prefetch = 0 : i64, scratch_operands = 1 : i64, tpu.core_type = #tpu.core_type<tc>} {
    %c0 = arith.constant 0 : index
    %c0_0 = arith.constant 0 : index
    %0 = vector.load %arg3[%c0, %c0_0] : memref<128x512xbf16, #tpu.memory_space<vmem>>, vector<128x512xbf16>
    %c0_1 = arith.constant 0 : index
    %c0_2 = arith.constant 0 : index
    %1 = vector.load %arg4[%c0_1, %c0_2] : memref<64x2xbf16, #tpu.memory_space<vmem>>, vector<64x2xbf16>
    %c0_3 = arith.constant 0 : index
    %c0_4 = arith.constant 0 : index
    %c0_5 = arith.constant 0 : index
    %2 = vector.load %arg0[%c0_3, %c0_4, %c0_5] : memref<2x8x1xf32, #tpu.memory_space<vmem>>, vector<2x8x1xf32>
    %c0_6 = arith.constant 0 : index
    %c0_7 = arith.constant 0 : index
    %3 = vector.load %arg1[%c0_6, %c0_7] : memref<1x512xf32, #tpu.memory_space<vmem>>, vector<1x512xf32>
    %4 = vector.shape_cast %3 : vector<1x512xf32> to vector<1x1x512xf32>
    %5 = vector.broadcast %2 : vector<2x8x1xf32> to vector<2x8x512xf32>
    %6 = vector.broadcast %4 : vector<1x1x512xf32> to vector<2x8x512xf32>
    %7 = arith.mulf %5, %6 : vector<2x8x512xf32>
    %c0_8 = arith.constant 0 : index
    %c0_9 = arith.constant 0 : index
    %8 = vector.load %arg2[%c0_8, %c0_9] : memref<1x512xf32, #tpu.memory_space<vmem>>, vector<1x512xf32>
    %9 = vector.shape_cast %8 : vector<1x512xf32> to vector<1x1x512xf32>
    %10 = vector.broadcast %9 : vector<1x1x512xf32> to vector<2x8x512xf32>
    %11 = arith.addf %7, %10 : vector<2x8x512xf32>
    %12 = vector.extract_strided_slice %11 {offsets = [0, 0, 0], sizes = [2, 1, 512], strides = [1, 1, 1]} : vector<2x8x512xf32> to vector<2x1x512xf32>
    %13 = vector.shape_cast %12 : vector<2x1x512xf32> to vector<2x512xf32>
    %14 = vector.extract_strided_slice %11 {offsets = [0, 1, 0], sizes = [2, 1, 512], strides = [1, 1, 1]} : vector<2x8x512xf32> to vector<2x1x512xf32>
    %15 = vector.shape_cast %14 : vector<2x1x512xf32> to vector<2x512xf32>
    %16 = vector.extract_strided_slice %11 {offsets = [0, 2, 0], sizes = [2, 1, 512], strides = [1, 1, 1]} : vector<2x8x512xf32> to vector<2x1x512xf32>
    %17 = vector.shape_cast %16 : vector<2x1x512xf32> to vector<2x512xf32>
    %18 = vector.extract_strided_slice %11 {offsets = [0, 3, 0], sizes = [2, 1, 512], strides = [1, 1, 1]} : vector<2x8x512xf32> to vector<2x1x512xf32>
    %19 = vector.shape_cast %18 : vector<2x1x512xf32> to vector<2x512xf32>
    %20 = vector.extract_strided_slice %11 {offsets = [0, 4, 0], sizes = [2, 1, 512], strides = [1, 1, 1]} : vector<2x8x512xf32> to vector<2x1x512xf32>
    %21 = vector.shape_cast %20 : vector<2x1x512xf32> to vector<2x512xf32>
    %22 = vector.extract_strided_slice %11 {offsets = [0, 5, 0], sizes = [2, 1, 512], strides = [1, 1, 1]} : vector<2x8x512xf32> to vector<2x1x512xf32>
    %23 = vector.shape_cast %22 : vector<2x1x512xf32> to vector<2x512xf32>
    %24 = vector.extract_strided_slice %11 {offsets = [0, 6, 0], sizes = [2, 1, 512], strides = [1, 1, 1]} : vector<2x8x512xf32> to vector<2x1x512xf32>
    %25 = vector.shape_cast %24 : vector<2x1x512xf32> to vector<2x512xf32>
    %26 = vector.extract_strided_slice %11 {offsets = [0, 7, 0], sizes = [2, 1, 512], strides = [1, 1, 1]} : vector<2x8x512xf32> to vector<2x1x512xf32>
    %27 = vector.shape_cast %26 : vector<2x1x512xf32> to vector<2x512xf32>
    %cst = arith.constant 0.000000e+00 : f32
    %28 = vector.broadcast %cst : f32 to vector<2x64xf32>
    %29 = vector.extract_strided_slice %13 {offsets = [0, 0], sizes = [2, 256], strides = [1, 1]} : vector<2x512xf32> to vector<2x256xf32>
    %30 = arith.negf %29 : vector<2x256xf32>
    %31 = math.exp %30 : vector<2x256xf32>
    %cst_10 = arith.constant 1.000000e+00 : f32
    %32 = vector.broadcast %cst_10 : f32 to vector<2x256xf32>
    %33 = arith.addf %32, %31 : vector<2x256xf32>
    %34 = arith.divf %32, %33 : vector<2x256xf32>
    %35 = vector.extract_strided_slice %34 {offsets = [0, 0], sizes = [2, 64], strides = [1, 1]} : vector<2x256xf32> to vector<2x64xf32>
    %36 = vector.extract_strided_slice %34 {offsets = [0, 64], sizes = [2, 64], strides = [1, 1]} : vector<2x256xf32> to vector<2x64xf32>
    %37 = vector.extract_strided_slice %34 {offsets = [0, 128], sizes = [2, 64], strides = [1, 1]} : vector<2x256xf32> to vector<2x64xf32>
    %38 = vector.extract_strided_slice %34 {offsets = [0, 192], sizes = [2, 64], strides = [1, 1]} : vector<2x256xf32> to vector<2x64xf32>
    %cst_11 = arith.constant 2.000000e+00 : f32
    %39 = vector.broadcast %cst_11 : f32 to vector<2x64xf32>
    %40 = arith.mulf %39, %38 : vector<2x64xf32>
    %cst_12 = arith.constant 1.000000e+00 : f32
    %41 = vector.broadcast %cst_12 : f32 to vector<2x64xf32>
    %42 = arith.subf %40, %41 : vector<2x64xf32>
    %43 = arith.mulf %36, %28 : vector<2x64xf32>
    %44 = arith.mulf %35, %42 : vector<2x64xf32>
    %45 = arith.addf %43, %44 : vector<2x64xf32>
    %46 = math.tanh %45 : vector<2x64xf32>
    %47 = arith.mulf %37, %46 : vector<2x64xf32>
    %c0_13 = arith.constant 0 : index
    %c0_14 = arith.constant 0 : index
    %48 = vector.load %arg7[%c0_13, %c0_14] : memref<2x128xf32, #tpu.memory_space<vmem>>, vector<2x64xf32>
    tpu.vector_store %arg7[%c0_13, %c0_14], %47 {strides = array<i32>} : memref<2x128xf32, #tpu.memory_space<vmem>>, vector<2x64xf32>,
    %c0_15 = arith.constant 0 : index
    %c64 = arith.constant 64 : index
    %49 = vector.load %arg7[%c0_15, %c64] : memref<2x128xf32, #tpu.memory_space<vmem>>, vector<2x64xf32>
    tpu.vector_store %arg7[%c0_15, %c64], %28 {strides = array<i32>} : memref<2x128xf32, #tpu.memory_space<vmem>>, vector<2x64xf32>,
    %c0_16 = arith.constant 0 : index
    %c0_17 = arith.constant 0 : index
    %50 = vector.load %arg7[%c0_16, %c0_17] : memref<2x128xf32, #tpu.memory_space<vmem>>, vector<2x128xf32>
    %51 = arith.truncf %50 : vector<2x128xf32> to vector<2x128xbf16>
    %cst_18 = arith.constant dense<0.000000e+00> : vector<2x512xf32>
    %52 = tpu.matmul %51, %0, %cst_18 {dimension_numbers = #tpu.dot_dimension_numbers<[1], [0], [0], [1], [0, 0, 1, 1], [], []>} : vector<2x128xbf16>, vector<128x512xbf16>, vector<2x512xf32> -> vector<2x512xf32>
    %53 = arith.addf %52, %15 : vector<2x512xf32>
    %54 = arith.negf %53 : vector<2x512xf32>
    %55 = math.exp %54 : vector<2x512xf32>
    %cst_19 = arith.constant 1.000000e+00 : f32
    %56 = vector.broadcast %cst_19 : f32 to vector<2x512xf32>
    %57 = arith.addf %56, %55 : vector<2x512xf32>
    %58 = arith.divf %56, %57 : vector<2x512xf32>
    %59 = vector.extract_strided_slice %58 {offsets = [0, 256], sizes = [2, 64], strides = [1, 1]} : vector<2x512xf32> to vector<2x64xf32>
    %60 = vector.extract_strided_slice %58 {offsets = [0, 320], sizes = [2, 64], strides = [1, 1]} : vector<2x512xf32> to vector<2x64xf32>
    %61 = vector.extract_strided_slice %58 {offsets = [0, 384], sizes = [2, 64], strides = [1, 1]} : vector<2x512xf32> to vector<2x64xf32>
    %62 = vector.extract_strided_slice %58 {offsets = [0, 448], sizes = [2, 64], strides = [1, 1]} : vector<2x512xf32> to vector<2x64xf32>
    %cst_20 = arith.constant 2.000000e+00 : f32
    %63 = vector.broadcast %cst_20 : f32 to vector<2x64xf32>
    %64 = arith.mulf %63, %62 : vector<2x64xf32>
    %cst_21 = arith.constant 1.000000e+00 : f32
    %65 = vector.broadcast %cst_21 : f32 to vector<2x64xf32>
    %66 = arith.subf %64, %65 : vector<2x64xf32>
    %67 = arith.mulf %60, %28 : vector<2x64xf32>
    %68 = arith.mulf %59, %66 : vector<2x64xf32>
    %69 = arith.addf %67, %68 : vector<2x64xf32>
    %70 = math.tanh %69 : vector<2x64xf32>
    %71 = arith.mulf %61, %70 : vector<2x64xf32>
    %c0_22 = arith.constant 0 : index
    %c64_23 = arith.constant 64 : index
    %72 = vector.load %arg7[%c0_22, %c64_23] : memref<2x128xf32, #tpu.memory_space<vmem>>, vector<2x64xf32>
    tpu.vector_store %arg7[%c0_22, %c64_23], %71 {strides = array<i32>} : memref<2x128xf32, #tpu.memory_space<vmem>>, vector<2x64xf32>,
    %73 = vector.extract_strided_slice %58 {offsets = [0, 0], sizes = [2, 64], strides = [1, 1]} : vector<2x512xf32> to vector<2x64xf32>
    %74 = vector.extract_strided_slice %58 {offsets = [0, 64], sizes = [2, 64], strides = [1, 1]} : vector<2x512xf32> to vector<2x64xf32>
    %75 = vector.extract_strided_slice %58 {offsets = [0, 128], sizes = [2, 64], strides = [1, 1]} : vector<2x512xf32> to vector<2x64xf32>
    %76 = vector.extract_strided_slice %58 {offsets = [0, 192], sizes = [2, 64], strides = [1, 1]} : vector<2x512xf32> to vector<2x64xf32>
    %cst_24 = arith.constant 2.000000e+00 : f32
    %77 = vector.broadcast %cst_24 : f32 to vector<2x64xf32>
    %78 = arith.mulf %77, %76 : vector<2x64xf32>
    %cst_25 = arith.constant 1.000000e+00 : f32
    %79 = vector.broadcast %cst_25 : f32 to vector<2x64xf32>
    %80 = arith.subf %78, %79 : vector<2x64xf32>
    %81 = arith.mulf %74, %45 : vector<2x64xf32>
    %82 = arith.mulf %73, %80 : vector<2x64xf32>
    %83 = arith.addf %81, %82 : vector<2x64xf32>
    %84 = math.tanh %83 : vector<2x64xf32>
    %85 = arith.mulf %75, %84 : vector<2x64xf32>
    %c0_26 = arith.constant 0 : index
    %c0_27 = arith.constant 0 : index
    %86 = vector.load %arg7[%c0_26, %c0_27] : memref<2x128xf32, #tpu.memory_space<vmem>>, vector<2x64xf32>
    tpu.vector_store %arg7[%c0_26, %c0_27], %85 {strides = array<i32>} : memref<2x128xf32, #tpu.memory_space<vmem>>, vector<2x64xf32>,
    %c0_28 = arith.constant 0 : index
    %c0_29 = arith.constant 0 : index
    %87 = vector.load %arg7[%c0_28, %c0_29] : memref<2x128xf32, #tpu.memory_space<vmem>>, vector<2x128xf32>
    %88 = arith.truncf %87 : vector<2x128xf32> to vector<2x128xbf16>
    %cst_30 = arith.constant dense<0.000000e+00> : vector<2x512xf32>
    %89 = tpu.matmul %88, %0, %cst_30 {dimension_numbers = #tpu.dot_dimension_numbers<[1], [0], [0], [1], [0, 0, 1, 1], [], []>} : vector<2x128xbf16>, vector<128x512xbf16>, vector<2x512xf32> -> vector<2x512xf32>
    %90 = arith.addf %89, %17 : vector<2x512xf32>
    %91 = arith.negf %90 : vector<2x512xf32>
    %92 = math.exp %91 : vector<2x512xf32>
    %cst_31 = arith.constant 1.000000e+00 : f32
    %93 = vector.broadcast %cst_31 : f32 to vector<2x512xf32>
    %94 = arith.addf %93, %92 : vector<2x512xf32>
    %95 = arith.divf %93, %94 : vector<2x512xf32>
    %96 = vector.extract_strided_slice %95 {offsets = [0, 256], sizes = [2, 64], strides = [1, 1]} : vector<2x512xf32> to vector<2x64xf32>
    %97 = vector.extract_strided_slice %95 {offsets = [0, 320], sizes = [2, 64], strides = [1, 1]} : vector<2x512xf32> to vector<2x64xf32>
    %98 = vector.extract_strided_slice %95 {offsets = [0, 384], sizes = [2, 64], strides = [1, 1]} : vector<2x512xf32> to vector<2x64xf32>
    %99 = vector.extract_strided_slice %95 {offsets = [0, 448], sizes = [2, 64], strides = [1, 1]} : vector<2x512xf32> to vector<2x64xf32>
    %cst_32 = arith.constant 2.000000e+00 : f32
    %100 = vector.broadcast %cst_32 : f32 to vector<2x64xf32>
    %101 = arith.mulf %100, %99 : vector<2x64xf32>
    %cst_33 = arith.constant 1.000000e+00 : f32
    %102 = vector.broadcast %cst_33 : f32 to vector<2x64xf32>
    %103 = arith.subf %101, %102 : vector<2x64xf32>
    %104 = arith.mulf %97, %69 : vector<2x64xf32>
    %105 = arith.mulf %96, %103 : vector<2x64xf32>
    %106 = arith.addf %104, %105 : vector<2x64xf32>
    %107 = math.tanh %106 : vector<2x64xf32>
    %108 = arith.mulf %98, %107 : vector<2x64xf32>
    %c0_34 = arith.constant 0 : index
    %c64_35 = arith.constant 64 : index
    %109 = vector.load %arg7[%c0_34, %c64_35] : memref<2x128xf32, #tpu.memory_space<vmem>>, vector<2x64xf32>
    tpu.vector_store %arg7[%c0_34, %c64_35], %108 {strides = array<i32>} : memref<2x128xf32, #tpu.memory_space<vmem>>, vector<2x64xf32>,
    %110 = vector.extract_strided_slice %95 {offsets = [0, 0], sizes = [2, 64], strides = [1, 1]} : vector<2x512xf32> to vector<2x64xf32>
    %111 = vector.extract_strided_slice %95 {offsets = [0, 64], sizes = [2, 64], strides = [1, 1]} : vector<2x512xf32> to vector<2x64xf32>
    %112 = vector.extract_strided_slice %95 {offsets = [0, 128], sizes = [2, 64], strides = [1, 1]} : vector<2x512xf32> to vector<2x64xf32>
    %113 = vector.extract_strided_slice %95 {offsets = [0, 192], sizes = [2, 64], strides = [1, 1]} : vector<2x512xf32> to vector<2x64xf32>
    %cst_36 = arith.constant 2.000000e+00 : f32
    %114 = vector.broadcast %cst_36 : f32 to vector<2x64xf32>
    %115 = arith.mulf %114, %113 : vector<2x64xf32>
    %cst_37 = arith.constant 1.000000e+00 : f32
    %116 = vector.broadcast %cst_37 : f32 to vector<2x64xf32>
    %117 = arith.subf %115, %116 : vector<2x64xf32>
    %118 = arith.mulf %111, %83 : vector<2x64xf32>
    %119 = arith.mulf %110, %117 : vector<2x64xf32>
    %120 = arith.addf %118, %119 : vector<2x64xf32>
    %121 = math.tanh %120 : vector<2x64xf32>
    %122 = arith.mulf %112, %121 : vector<2x64xf32>
    %c0_38 = arith.constant 0 : index
    %c0_39 = arith.constant 0 : index
    %123 = vector.load %arg7[%c0_38, %c0_39] : memref<2x128xf32, #tpu.memory_space<vmem>>, vector<2x64xf32>
    tpu.vector_store %arg7[%c0_38, %c0_39], %122 {strides = array<i32>} : memref<2x128xf32, #tpu.memory_space<vmem>>, vector<2x64xf32>,
    %c0_40 = arith.constant 0 : index
    %c0_41 = arith.constant 0 : index
    %124 = vector.load %arg7[%c0_40, %c0_41] : memref<2x128xf32, #tpu.memory_space<vmem>>, vector<2x128xf32>
    %125 = arith.truncf %124 : vector<2x128xf32> to vector<2x128xbf16>
    %cst_42 = arith.constant dense<0.000000e+00> : vector<2x512xf32>
    %126 = tpu.matmul %125, %0, %cst_42 {dimension_numbers = #tpu.dot_dimension_numbers<[1], [0], [0], [1], [0, 0, 1, 1], [], []>} : vector<2x128xbf16>, vector<128x512xbf16>, vector<2x512xf32> -> vector<2x512xf32>
    %127 = arith.addf %126, %19 : vector<2x512xf32>
    %128 = arith.negf %127 : vector<2x512xf32>
    %129 = math.exp %128 : vector<2x512xf32>
    %cst_43 = arith.constant 1.000000e+00 : f32
    %130 = vector.broadcast %cst_43 : f32 to vector<2x512xf32>
    %131 = arith.addf %130, %129 : vector<2x512xf32>
    %132 = arith.divf %130, %131 : vector<2x512xf32>
    %133 = vector.extract_strided_slice %132 {offsets = [0, 256], sizes = [2, 64], strides = [1, 1]} : vector<2x512xf32> to vector<2x64xf32>
    %134 = vector.extract_strided_slice %132 {offsets = [0, 320], sizes = [2, 64], strides = [1, 1]} : vector<2x512xf32> to vector<2x64xf32>
    %135 = vector.extract_strided_slice %132 {offsets = [0, 384], sizes = [2, 64], strides = [1, 1]} : vector<2x512xf32> to vector<2x64xf32>
    %136 = vector.extract_strided_slice %132 {offsets = [0, 448], sizes = [2, 64], strides = [1, 1]} : vector<2x512xf32> to vector<2x64xf32>
    %cst_44 = arith.constant 2.000000e+00 : f32
    %137 = vector.broadcast %cst_44 : f32 to vector<2x64xf32>
    %138 = arith.mulf %137, %136 : vector<2x64xf32>
    %cst_45 = arith.constant 1.000000e+00 : f32
    %139 = vector.broadcast %cst_45 : f32 to vector<2x64xf32>
    %140 = arith.subf %138, %139 : vector<2x64xf32>
    %141 = arith.mulf %134, %106 : vector<2x64xf32>
    %142 = arith.mulf %133, %140 : vector<2x64xf32>
    %143 = arith.addf %141, %142 : vector<2x64xf32>
    %144 = math.tanh %143 : vector<2x64xf32>
    %145 = arith.mulf %135, %144 : vector<2x64xf32>
    %c0_46 = arith.constant 0 : index
    %c64_47 = arith.constant 64 : index
    %146 = vector.load %arg7[%c0_46, %c64_47] : memref<2x128xf32, #tpu.memory_space<vmem>>, vector<2x64xf32>
    tpu.vector_store %arg7[%c0_46, %c64_47], %145 {strides = array<i32>} : memref<2x128xf32, #tpu.memory_space<vmem>>, vector<2x64xf32>,
    %147 = vector.extract_strided_slice %132 {offsets = [0, 0], sizes = [2, 64], strides = [1, 1]} : vector<2x512xf32> to vector<2x64xf32>
    %148 = vector.extract_strided_slice %132 {offsets = [0, 64], sizes = [2, 64], strides = [1, 1]} : vector<2x512xf32> to vector<2x64xf32>
    %149 = vector.extract_strided_slice %132 {offsets = [0, 128], sizes = [2, 64], strides = [1, 1]} : vector<2x512xf32> to vector<2x64xf32>
    %150 = vector.extract_strided_slice %132 {offsets = [0, 192], sizes = [2, 64], strides = [1, 1]} : vector<2x512xf32> to vector<2x64xf32>
    %cst_48 = arith.constant 2.000000e+00 : f32
    %151 = vector.broadcast %cst_48 : f32 to vector<2x64xf32>
    %152 = arith.mulf %151, %150 : vector<2x64xf32>
    %cst_49 = arith.constant 1.000000e+00 : f32
    %153 = vector.broadcast %cst_49 : f32 to vector<2x64xf32>
    %154 = arith.subf %152, %153 : vector<2x64xf32>
    %155 = arith.mulf %148, %120 : vector<2x64xf32>
    %156 = arith.mulf %147, %154 : vector<2x64xf32>
    %157 = arith.addf %155, %156 : vector<2x64xf32>
    %158 = math.tanh %157 : vector<2x64xf32>
    %159 = arith.mulf %149, %158 : vector<2x64xf32>
    %c0_50 = arith.constant 0 : index
    %c0_51 = arith.constant 0 : index
    %160 = vector.load %arg7[%c0_50, %c0_51] : memref<2x128xf32, #tpu.memory_space<vmem>>, vector<2x64xf32>
    tpu.vector_store %arg7[%c0_50, %c0_51], %159 {strides = array<i32>} : memref<2x128xf32, #tpu.memory_space<vmem>>, vector<2x64xf32>,
    %c0_52 = arith.constant 0 : index
    %c0_53 = arith.constant 0 : index
    %161 = vector.load %arg7[%c0_52, %c0_53] : memref<2x128xf32, #tpu.memory_space<vmem>>, vector<2x128xf32>
    %162 = arith.truncf %161 : vector<2x128xf32> to vector<2x128xbf16>
    %cst_54 = arith.constant dense<0.000000e+00> : vector<2x512xf32>
    %163 = tpu.matmul %162, %0, %cst_54 {dimension_numbers = #tpu.dot_dimension_numbers<[1], [0], [0], [1], [0, 0, 1, 1], [], []>} : vector<2x128xbf16>, vector<128x512xbf16>, vector<2x512xf32> -> vector<2x512xf32>
    %164 = arith.addf %163, %21 : vector<2x512xf32>
    %165 = arith.negf %164 : vector<2x512xf32>
    %166 = math.exp %165 : vector<2x512xf32>
    %cst_55 = arith.constant 1.000000e+00 : f32
    %167 = vector.broadcast %cst_55 : f32 to vector<2x512xf32>
    %168 = arith.addf %167, %166 : vector<2x512xf32>
    %169 = arith.divf %167, %168 : vector<2x512xf32>
    %170 = vector.extract_strided_slice %169 {offsets = [0, 256], sizes = [2, 64], strides = [1, 1]} : vector<2x512xf32> to vector<2x64xf32>
    %171 = vector.extract_strided_slice %169 {offsets = [0, 320], sizes = [2, 64], strides = [1, 1]} : vector<2x512xf32> to vector<2x64xf32>
    %172 = vector.extract_strided_slice %169 {offsets = [0, 384], sizes = [2, 64], strides = [1, 1]} : vector<2x512xf32> to vector<2x64xf32>
    %173 = vector.extract_strided_slice %169 {offsets = [0, 448], sizes = [2, 64], strides = [1, 1]} : vector<2x512xf32> to vector<2x64xf32>
    %cst_56 = arith.constant 2.000000e+00 : f32
    %174 = vector.broadcast %cst_56 : f32 to vector<2x64xf32>
    %175 = arith.mulf %174, %173 : vector<2x64xf32>
    %cst_57 = arith.constant 1.000000e+00 : f32
    %176 = vector.broadcast %cst_57 : f32 to vector<2x64xf32>
    %177 = arith.subf %175, %176 : vector<2x64xf32>
    %178 = arith.mulf %171, %143 : vector<2x64xf32>
    %179 = arith.mulf %170, %177 : vector<2x64xf32>
    %180 = arith.addf %178, %179 : vector<2x64xf32>
    %181 = math.tanh %180 : vector<2x64xf32>
    %182 = arith.mulf %172, %181 : vector<2x64xf32>
    %c0_58 = arith.constant 0 : index
    %c64_59 = arith.constant 64 : index
    %183 = vector.load %arg7[%c0_58, %c64_59] : memref<2x128xf32, #tpu.memory_space<vmem>>, vector<2x64xf32>
    tpu.vector_store %arg7[%c0_58, %c64_59], %182 {strides = array<i32>} : memref<2x128xf32, #tpu.memory_space<vmem>>, vector<2x64xf32>,
    %184 = vector.extract_strided_slice %169 {offsets = [0, 0], sizes = [2, 64], strides = [1, 1]} : vector<2x512xf32> to vector<2x64xf32>
    %185 = vector.extract_strided_slice %169 {offsets = [0, 64], sizes = [2, 64], strides = [1, 1]} : vector<2x512xf32> to vector<2x64xf32>
    %186 = vector.extract_strided_slice %169 {offsets = [0, 128], sizes = [2, 64], strides = [1, 1]} : vector<2x512xf32> to vector<2x64xf32>
    %187 = vector.extract_strided_slice %169 {offsets = [0, 192], sizes = [2, 64], strides = [1, 1]} : vector<2x512xf32> to vector<2x64xf32>
    %cst_60 = arith.constant 2.000000e+00 : f32
    %188 = vector.broadcast %cst_60 : f32 to vector<2x64xf32>
    %189 = arith.mulf %188, %187 : vector<2x64xf32>
    %cst_61 = arith.constant 1.000000e+00 : f32
    %190 = vector.broadcast %cst_61 : f32 to vector<2x64xf32>
    %191 = arith.subf %189, %190 : vector<2x64xf32>
    %192 = arith.mulf %185, %157 : vector<2x64xf32>
    %193 = arith.mulf %184, %191 : vector<2x64xf32>
    %194 = arith.addf %192, %193 : vector<2x64xf32>
    %195 = math.tanh %194 : vector<2x64xf32>
    %196 = arith.mulf %186, %195 : vector<2x64xf32>
    %c0_62 = arith.constant 0 : index
    %c0_63 = arith.constant 0 : index
    %197 = vector.load %arg7[%c0_62, %c0_63] : memref<2x128xf32, #tpu.memory_space<vmem>>, vector<2x64xf32>
    tpu.vector_store %arg7[%c0_62, %c0_63], %196 {strides = array<i32>} : memref<2x128xf32, #tpu.memory_space<vmem>>, vector<2x64xf32>,
    %c0_64 = arith.constant 0 : index
    %c0_65 = arith.constant 0 : index
    %198 = vector.load %arg7[%c0_64, %c0_65] : memref<2x128xf32, #tpu.memory_space<vmem>>, vector<2x128xf32>
    %199 = arith.truncf %198 : vector<2x128xf32> to vector<2x128xbf16>
    %cst_66 = arith.constant dense<0.000000e+00> : vector<2x512xf32>
    %200 = tpu.matmul %199, %0, %cst_66 {dimension_numbers = #tpu.dot_dimension_numbers<[1], [0], [0], [1], [0, 0, 1, 1], [], []>} : vector<2x128xbf16>, vector<128x512xbf16>, vector<2x512xf32> -> vector<2x512xf32>
    %201 = arith.addf %200, %23 : vector<2x512xf32>
    %202 = arith.negf %201 : vector<2x512xf32>
    %203 = math.exp %202 : vector<2x512xf32>
    %cst_67 = arith.constant 1.000000e+00 : f32
    %204 = vector.broadcast %cst_67 : f32 to vector<2x512xf32>
    %205 = arith.addf %204, %203 : vector<2x512xf32>
    %206 = arith.divf %204, %205 : vector<2x512xf32>
    %207 = vector.extract_strided_slice %206 {offsets = [0, 256], sizes = [2, 64], strides = [1, 1]} : vector<2x512xf32> to vector<2x64xf32>
    %208 = vector.extract_strided_slice %206 {offsets = [0, 320], sizes = [2, 64], strides = [1, 1]} : vector<2x512xf32> to vector<2x64xf32>
    %209 = vector.extract_strided_slice %206 {offsets = [0, 384], sizes = [2, 64], strides = [1, 1]} : vector<2x512xf32> to vector<2x64xf32>
    %210 = vector.extract_strided_slice %206 {offsets = [0, 448], sizes = [2, 64], strides = [1, 1]} : vector<2x512xf32> to vector<2x64xf32>
    %cst_68 = arith.constant 2.000000e+00 : f32
    %211 = vector.broadcast %cst_68 : f32 to vector<2x64xf32>
    %212 = arith.mulf %211, %210 : vector<2x64xf32>
    %cst_69 = arith.constant 1.000000e+00 : f32
    %213 = vector.broadcast %cst_69 : f32 to vector<2x64xf32>
    %214 = arith.subf %212, %213 : vector<2x64xf32>
    %215 = arith.mulf %208, %180 : vector<2x64xf32>
    %216 = arith.mulf %207, %214 : vector<2x64xf32>
    %217 = arith.addf %215, %216 : vector<2x64xf32>
    %218 = math.tanh %217 : vector<2x64xf32>
    %219 = arith.mulf %209, %218 : vector<2x64xf32>
    %c0_70 = arith.constant 0 : index
    %c64_71 = arith.constant 64 : index
    %220 = vector.load %arg7[%c0_70, %c64_71] : memref<2x128xf32, #tpu.memory_space<vmem>>, vector<2x64xf32>
    tpu.vector_store %arg7[%c0_70, %c64_71], %219 {strides = array<i32>} : memref<2x128xf32, #tpu.memory_space<vmem>>, vector<2x64xf32>,
    %221 = vector.extract_strided_slice %206 {offsets = [0, 0], sizes = [2, 64], strides = [1, 1]} : vector<2x512xf32> to vector<2x64xf32>
    %222 = vector.extract_strided_slice %206 {offsets = [0, 64], sizes = [2, 64], strides = [1, 1]} : vector<2x512xf32> to vector<2x64xf32>
    %223 = vector.extract_strided_slice %206 {offsets = [0, 128], sizes = [2, 64], strides = [1, 1]} : vector<2x512xf32> to vector<2x64xf32>
    %224 = vector.extract_strided_slice %206 {offsets = [0, 192], sizes = [2, 64], strides = [1, 1]} : vector<2x512xf32> to vector<2x64xf32>
    %cst_72 = arith.constant 2.000000e+00 : f32
    %225 = vector.broadcast %cst_72 : f32 to vector<2x64xf32>
    %226 = arith.mulf %225, %224 : vector<2x64xf32>
    %cst_73 = arith.constant 1.000000e+00 : f32
    %227 = vector.broadcast %cst_73 : f32 to vector<2x64xf32>
    %228 = arith.subf %226, %227 : vector<2x64xf32>
    %229 = arith.mulf %222, %194 : vector<2x64xf32>
    %230 = arith.mulf %221, %228 : vector<2x64xf32>
    %231 = arith.addf %229, %230 : vector<2x64xf32>
    %232 = math.tanh %231 : vector<2x64xf32>
    %233 = arith.mulf %223, %232 : vector<2x64xf32>
    %c0_74 = arith.constant 0 : index
    %c0_75 = arith.constant 0 : index
    %234 = vector.load %arg7[%c0_74, %c0_75] : memref<2x128xf32, #tpu.memory_space<vmem>>, vector<2x64xf32>
    tpu.vector_store %arg7[%c0_74, %c0_75], %233 {strides = array<i32>} : memref<2x128xf32, #tpu.memory_space<vmem>>, vector<2x64xf32>,
    %c0_76 = arith.constant 0 : index
    %c0_77 = arith.constant 0 : index
    %235 = vector.load %arg7[%c0_76, %c0_77] : memref<2x128xf32, #tpu.memory_space<vmem>>, vector<2x128xf32>
    %236 = arith.truncf %235 : vector<2x128xf32> to vector<2x128xbf16>
    %cst_78 = arith.constant dense<0.000000e+00> : vector<2x512xf32>
    %237 = tpu.matmul %236, %0, %cst_78 {dimension_numbers = #tpu.dot_dimension_numbers<[1], [0], [0], [1], [0, 0, 1, 1], [], []>} : vector<2x128xbf16>, vector<128x512xbf16>, vector<2x512xf32> -> vector<2x512xf32>
    %238 = arith.addf %237, %25 : vector<2x512xf32>
    %239 = arith.negf %238 : vector<2x512xf32>
    %240 = math.exp %239 : vector<2x512xf32>
    %cst_79 = arith.constant 1.000000e+00 : f32
    %241 = vector.broadcast %cst_79 : f32 to vector<2x512xf32>
    %242 = arith.addf %241, %240 : vector<2x512xf32>
    %243 = arith.divf %241, %242 : vector<2x512xf32>
    %244 = vector.extract_strided_slice %243 {offsets = [0, 256], sizes = [2, 64], strides = [1, 1]} : vector<2x512xf32> to vector<2x64xf32>
    %245 = vector.extract_strided_slice %243 {offsets = [0, 320], sizes = [2, 64], strides = [1, 1]} : vector<2x512xf32> to vector<2x64xf32>
    %246 = vector.extract_strided_slice %243 {offsets = [0, 384], sizes = [2, 64], strides = [1, 1]} : vector<2x512xf32> to vector<2x64xf32>
    %247 = vector.extract_strided_slice %243 {offsets = [0, 448], sizes = [2, 64], strides = [1, 1]} : vector<2x512xf32> to vector<2x64xf32>
    %cst_80 = arith.constant 2.000000e+00 : f32
    %248 = vector.broadcast %cst_80 : f32 to vector<2x64xf32>
    %249 = arith.mulf %248, %247 : vector<2x64xf32>
    %cst_81 = arith.constant 1.000000e+00 : f32
    %250 = vector.broadcast %cst_81 : f32 to vector<2x64xf32>
    %251 = arith.subf %249, %250 : vector<2x64xf32>
    %252 = arith.mulf %245, %217 : vector<2x64xf32>
    %253 = arith.mulf %244, %251 : vector<2x64xf32>
    %254 = arith.addf %252, %253 : vector<2x64xf32>
    %255 = math.tanh %254 : vector<2x64xf32>
    %256 = arith.mulf %246, %255 : vector<2x64xf32>
    %c0_82 = arith.constant 0 : index
    %c64_83 = arith.constant 64 : index
    %257 = vector.load %arg7[%c0_82, %c64_83] : memref<2x128xf32, #tpu.memory_space<vmem>>, vector<2x64xf32>
    tpu.vector_store %arg7[%c0_82, %c64_83], %256 {strides = array<i32>} : memref<2x128xf32, #tpu.memory_space<vmem>>, vector<2x64xf32>,
    %258 = vector.extract_strided_slice %243 {offsets = [0, 0], sizes = [2, 64], strides = [1, 1]} : vector<2x512xf32> to vector<2x64xf32>
    %259 = vector.extract_strided_slice %243 {offsets = [0, 64], sizes = [2, 64], strides = [1, 1]} : vector<2x512xf32> to vector<2x64xf32>
    %260 = vector.extract_strided_slice %243 {offsets = [0, 128], sizes = [2, 64], strides = [1, 1]} : vector<2x512xf32> to vector<2x64xf32>
    %261 = vector.extract_strided_slice %243 {offsets = [0, 192], sizes = [2, 64], strides = [1, 1]} : vector<2x512xf32> to vector<2x64xf32>
    %cst_84 = arith.constant 2.000000e+00 : f32
    %262 = vector.broadcast %cst_84 : f32 to vector<2x64xf32>
    %263 = arith.mulf %262, %261 : vector<2x64xf32>
    %cst_85 = arith.constant 1.000000e+00 : f32
    %264 = vector.broadcast %cst_85 : f32 to vector<2x64xf32>
    %265 = arith.subf %263, %264 : vector<2x64xf32>
    %266 = arith.mulf %259, %231 : vector<2x64xf32>
    %267 = arith.mulf %258, %265 : vector<2x64xf32>
    %268 = arith.addf %266, %267 : vector<2x64xf32>
    %269 = math.tanh %268 : vector<2x64xf32>
    %270 = arith.mulf %260, %269 : vector<2x64xf32>
    %c0_86 = arith.constant 0 : index
    %c0_87 = arith.constant 0 : index
    %271 = vector.load %arg7[%c0_86, %c0_87] : memref<2x128xf32, #tpu.memory_space<vmem>>, vector<2x64xf32>
    tpu.vector_store %arg7[%c0_86, %c0_87], %270 {strides = array<i32>} : memref<2x128xf32, #tpu.memory_space<vmem>>, vector<2x64xf32>,
    %c0_88 = arith.constant 0 : index
    %c0_89 = arith.constant 0 : index
    %272 = vector.load %arg7[%c0_88, %c0_89] : memref<2x128xf32, #tpu.memory_space<vmem>>, vector<2x128xf32>
    %273 = arith.truncf %272 : vector<2x128xf32> to vector<2x128xbf16>
    %cst_90 = arith.constant dense<0.000000e+00> : vector<2x512xf32>
    %274 = tpu.matmul %273, %0, %cst_90 {dimension_numbers = #tpu.dot_dimension_numbers<[1], [0], [0], [1], [0, 0, 1, 1], [], []>} : vector<2x128xbf16>, vector<128x512xbf16>, vector<2x512xf32> -> vector<2x512xf32>
    %275 = arith.addf %274, %27 : vector<2x512xf32>
    %276 = arith.negf %275 : vector<2x512xf32>
    %277 = math.exp %276 : vector<2x512xf32>
    %cst_91 = arith.constant 1.000000e+00 : f32
    %278 = vector.broadcast %cst_91 : f32 to vector<2x512xf32>
    %279 = arith.addf %278, %277 : vector<2x512xf32>
    %280 = arith.divf %278, %279 : vector<2x512xf32>
    %281 = vector.extract_strided_slice %280 {offsets = [0, 256], sizes = [2, 64], strides = [1, 1]} : vector<2x512xf32> to vector<2x64xf32>
    %282 = vector.extract_strided_slice %280 {offsets = [0, 320], sizes = [2, 64], strides = [1, 1]} : vector<2x512xf32> to vector<2x64xf32>
    %283 = vector.extract_strided_slice %280 {offsets = [0, 384], sizes = [2, 64], strides = [1, 1]} : vector<2x512xf32> to vector<2x64xf32>
    %284 = vector.extract_strided_slice %280 {offsets = [0, 448], sizes = [2, 64], strides = [1, 1]} : vector<2x512xf32> to vector<2x64xf32>
    %cst_92 = arith.constant 2.000000e+00 : f32
    %285 = vector.broadcast %cst_92 : f32 to vector<2x64xf32>
    %286 = arith.mulf %285, %284 : vector<2x64xf32>
    %cst_93 = arith.constant 1.000000e+00 : f32
    %287 = vector.broadcast %cst_93 : f32 to vector<2x64xf32>
    %288 = arith.subf %286, %287 : vector<2x64xf32>
    %289 = arith.mulf %282, %254 : vector<2x64xf32>
    %290 = arith.mulf %281, %288 : vector<2x64xf32>
    %291 = arith.addf %289, %290 : vector<2x64xf32>
    %292 = math.tanh %291 : vector<2x64xf32>
    %293 = arith.mulf %283, %292 : vector<2x64xf32>
    %c0_94 = arith.constant 0 : index
    %c64_95 = arith.constant 64 : index
    %294 = vector.load %arg7[%c0_94, %c64_95] : memref<2x128xf32, #tpu.memory_space<vmem>>, vector<2x64xf32>
    tpu.vector_store %arg7[%c0_94, %c64_95], %293 {strides = array<i32>} : memref<2x128xf32, #tpu.memory_space<vmem>>, vector<2x64xf32>,
    %295 = vector.extract_strided_slice %280 {offsets = [0, 0], sizes = [2, 64], strides = [1, 1]} : vector<2x512xf32> to vector<2x64xf32>
    %296 = vector.extract_strided_slice %280 {offsets = [0, 64], sizes = [2, 64], strides = [1, 1]} : vector<2x512xf32> to vector<2x64xf32>
    %297 = vector.extract_strided_slice %280 {offsets = [0, 128], sizes = [2, 64], strides = [1, 1]} : vector<2x512xf32> to vector<2x64xf32>
    %298 = vector.extract_strided_slice %280 {offsets = [0, 192], sizes = [2, 64], strides = [1, 1]} : vector<2x512xf32> to vector<2x64xf32>
    %cst_96 = arith.constant 2.000000e+00 : f32
    %299 = vector.broadcast %cst_96 : f32 to vector<2x64xf32>
    %300 = arith.mulf %299, %298 : vector<2x64xf32>
    %cst_97 = arith.constant 1.000000e+00 : f32
    %301 = vector.broadcast %cst_97 : f32 to vector<2x64xf32>
    %302 = arith.subf %300, %301 : vector<2x64xf32>
    %303 = arith.mulf %296, %268 : vector<2x64xf32>
    %304 = arith.mulf %295, %302 : vector<2x64xf32>
    %305 = arith.addf %303, %304 : vector<2x64xf32>
    %306 = math.tanh %305 : vector<2x64xf32>
    %307 = arith.mulf %297, %306 : vector<2x64xf32>
    %c0_98 = arith.constant 0 : index
    %c0_99 = arith.constant 0 : index
    %308 = vector.load %arg7[%c0_98, %c0_99] : memref<2x128xf32, #tpu.memory_space<vmem>>, vector<2x64xf32>
    tpu.vector_store %arg7[%c0_98, %c0_99], %307 {strides = array<i32>} : memref<2x128xf32, #tpu.memory_space<vmem>>, vector<2x64xf32>,
    %c0_100 = arith.constant 0 : index
    %c0_101 = arith.constant 0 : index
    %309 = vector.load %arg7[%c0_100, %c0_101] : memref<2x128xf32, #tpu.memory_space<vmem>>, vector<2x128xf32>
    %310 = arith.truncf %309 : vector<2x128xf32> to vector<2x128xbf16>
    %cst_102 = arith.constant dense<0.000000e+00> : vector<2x512xf32>
    %311 = tpu.matmul %310, %0, %cst_102 {dimension_numbers = #tpu.dot_dimension_numbers<[1], [0], [0], [1], [0, 0, 1, 1], [], []>} : vector<2x128xbf16>, vector<128x512xbf16>, vector<2x512xf32> -> vector<2x512xf32>
    %312 = vector.extract_strided_slice %311 {offsets = [0, 256], sizes = [2, 256], strides = [1, 1]} : vector<2x512xf32> to vector<2x256xf32>
    %313 = vector.extract_strided_slice %13 {offsets = [0, 256], sizes = [2, 256], strides = [1, 1]} : vector<2x512xf32> to vector<2x256xf32>
    %314 = arith.addf %312, %313 : vector<2x256xf32>
    %315 = arith.negf %314 : vector<2x256xf32>
    %316 = math.exp %315 : vector<2x256xf32>
    %cst_103 = arith.constant 1.000000e+00 : f32
    %317 = vector.broadcast %cst_103 : f32 to vector<2x256xf32>
    %318 = arith.addf %317, %316 : vector<2x256xf32>
    %319 = arith.divf %317, %318 : vector<2x256xf32>
    %320 = vector.extract_strided_slice %319 {offsets = [0, 0], sizes = [2, 64], strides = [1, 1]} : vector<2x256xf32> to vector<2x64xf32>
    %321 = vector.extract_strided_slice %319 {offsets = [0, 64], sizes = [2, 64], strides = [1, 1]} : vector<2x256xf32> to vector<2x64xf32>
    %322 = vector.extract_strided_slice %319 {offsets = [0, 128], sizes = [2, 64], strides = [1, 1]} : vector<2x256xf32> to vector<2x64xf32>
    %323 = vector.extract_strided_slice %319 {offsets = [0, 192], sizes = [2, 64], strides = [1, 1]} : vector<2x256xf32> to vector<2x64xf32>
    %cst_104 = arith.constant 2.000000e+00 : f32
    %324 = vector.broadcast %cst_104 : f32 to vector<2x64xf32>
    %325 = arith.mulf %324, %323 : vector<2x64xf32>
    %cst_105 = arith.constant 1.000000e+00 : f32
    %326 = vector.broadcast %cst_105 : f32 to vector<2x64xf32>
    %327 = arith.subf %325, %326 : vector<2x64xf32>
    %328 = arith.mulf %321, %291 : vector<2x64xf32>
    %329 = arith.mulf %320, %327 : vector<2x64xf32>
    %330 = arith.addf %328, %329 : vector<2x64xf32>
    %331 = math.tanh %330 : vector<2x64xf32>
    %332 = arith.mulf %322, %331 : vector<2x64xf32>
    %333 = arith.truncf %332 : vector<2x64xf32> to vector<2x64xbf16>
    %cst_106 = arith.constant dense<0.000000e+00> : vector<2x2xf32>
    %334 = tpu.matmul %333, %1, %cst_106 {dimension_numbers = #tpu.dot_dimension_numbers<[1], [0], [0], [1], [0, 0, 1, 1], [], []>} : vector<2x64xbf16>, vector<64x2xbf16>, vector<2x2xf32> -> vector<2x2xf32>
    %c0_107 = arith.constant 0 : index
    %c0_108 = arith.constant 0 : index
    %335 = vector.load %arg5[%c0_107, %c0_108] : memref<1x2xf32, #tpu.memory_space<vmem>>, vector<1x2xf32>
    %336 = vector.broadcast %335 : vector<1x2xf32> to vector<2x2xf32>
    %337 = arith.addf %334, %336 : vector<2x2xf32>
    %c0_109 = arith.constant 0 : index
    %c0_110 = arith.constant 0 : index
    %338 = vector.load %arg6[%c0_109, %c0_110] : memref<2x2xf32, #tpu.memory_space<vmem>>, vector<2x2xf32>
    tpu.vector_store %arg6[%c0_109, %c0_110], %337 {strides = array<i32>} : memref<2x2xf32, #tpu.memory_space<vmem>>, vector<2x2xf32>,
    return
  }
}

</mosaic_0001>

<llo_original>
// kernel: tpu_custom_call.1
$region0: #{tpu_custom_call.1}
  #allocation0 [shape = 'u32[]', space=smem, size = 0x4, offset = 0x4, fixed_abs, tag = 'smem constant byte address 0x4 - core index']
  #allocation1 [shape = 'u32[144,128]{1,0:T(1,128)}', space=vmem, size = 0x12000, scoped, tag = 'internal scratch']
  #allocation2 [shape = 'f32[2,128]{1,0:T(2,128)}', space=vmem, size = 0x400, scoped, tag = 'scratch operand']
  %s0 = inlined_call_operand.vmem [shape: f32[2,8,1], index: 0, kind: input, shape index: {}]
  %s1 = inlined_call_operand.vmem [shape: f32[1,512], index: 1, kind: input, shape index: {}]
  %s2 = inlined_call_operand.vmem [shape: f32[1,512], index: 2, kind: input, shape index: {}]
  %s3 = inlined_call_operand.hbm [shape: bf16[128,512], index: 3, kind: input, shape index: {}]
  %s4 = inlined_call_operand.vmem [shape: bf16[64,2], index: 4, kind: input, shape index: {}]
  %s5 = inlined_call_operand.vmem [shape: f32[1,2], index: 5, kind: input, shape index: {}]
  %s6 = inlined_call_operand.hbm [shape: f32[2,2], index: 6, kind: output, shape index: {}]
  %s7 = sld [smem:[#allocation0]]
  $region38: #{tpu_custom_call.1} parent=0
    _
  %s9 = ssub.s32 1, %s7
  %s10 = scalar_select 0, %s9, %s7
  $region1: #{tpu_custom_call.1} parent=0
    #allocation3 [shape = 'u8[131072]{0}', space=vmem, size = 0x20000, scoped, tag = 'input window, operand 3, single buffered']
    #allocation4 [shape = 's32[1]{0}', space=sflag, size = 0x4, scoped, tag = 'scoped memory for tpu_custom_call.1']
    #allocation5 [shape = 's32[1]{0}', space=sflag, size = 0x4, scoped, tag = 'scoped memory for tpu_custom_call.1']
    #allocation6 [shape = 'u8[1024]{0}', space=vmem, size = 0x400, scoped, tag = 'output window, operand 0, single buffered']
    %11 = vsyncpa [#allocation4], 0
    %12 = vsyncpa [#allocation5], 0
    // Predicated region
    $region2: #{tpu_custom_call.1} parent=1 // pred_check
      _
    $region3: #{tpu_custom_call.1} parent=1 // pred_check_branch
      %14 = sbr.rel (0) target = $region5
    $region4: #{tpu_custom_call.1} parent=1 // pred_region
      _
    $region5: #{tpu_custom_call.1} parent=1 // pred_fallthru
      _
    // Predicated region
    $region6: #{tpu_custom_call.1} parent=1 // pred_check
      _
    $region7: #{tpu_custom_call.1} parent=1 // pred_check_branch
      %16 = sbr.rel (0) target = $region9
    $region8: #{tpu_custom_call.1} parent=1 // pred_region
      _
    $region9: #{tpu_custom_call.1} parent=1 // pred_fallthru
      _
    // Predicated region
    $region10: #{tpu_custom_call.1} parent=1 // pred_check
      _
    $region11: #{tpu_custom_call.1} parent=1 // pred_check_branch
      %18 = sbr.rel (0) target = $region13
    $region12: #{tpu_custom_call.1} parent=1 // pred_region
      _
    $region13: #{tpu_custom_call.1} parent=1 // pred_fallthru
      _
    // Predicated region
    $region14: #{tpu_custom_call.1} parent=1 // pred_check
      _
    $region15: #{tpu_custom_call.1} parent=1 // pred_check_branch
      %20 = sbr.rel (0) target = $region17
    $region16: #{tpu_custom_call.1} parent=1 // pred_region
      %s22 = ssub.s32 4096, 4096
      %23 = vsyncadd [#allocation4], %s22
      %s24 = sshll.u32 [#allocation3], 4
      %s25 = int_to_ptr.vmem [resolvable:$true] %s24
      %30 = dma.hbm_to_vmem [thread:$0]  %s3, 4096, %s25, [#allocation4], 256, 256, 16
    $region17: #{tpu_custom_call.1} parent=1 // pred_fallthru
      _
    // Predicated region
    $region18: #{tpu_custom_call.1} parent=1 // pred_check
      _
    $region19: #{tpu_custom_call.1} parent=1 // pred_check_branch
      %32 = sbr.rel (0) target = $region21
    $region20: #{tpu_custom_call.1} parent=1 // pred_region
      _
    $region21: #{tpu_custom_call.1} parent=1 // pred_fallthru
      _
    // Predicated region
    $region22: #{tpu_custom_call.1} parent=1 // pred_check
      _
    $region23: #{tpu_custom_call.1} parent=1 // pred_check_branch
      %34 = sbr.rel (0) target = $region25
    $region24: #{tpu_custom_call.1} parent=1 // pred_region
      _
    $region25: #{tpu_custom_call.1} parent=1 // pred_fallthru
      _
    // Predicated region
    $region26: #{tpu_custom_call.1} parent=1 // pred_check
      _
    $region27: #{tpu_custom_call.1} parent=1 // pred_check_branch
      %36 = sbr.rel (0) target = $region29
    $region28: #{tpu_custom_call.1} parent=1 // pred_region
      %37 = dma.done [#allocation4], 4096
    $region29: #{tpu_custom_call.1} parent=1 // pred_fallthru
      _
    %v39 = vld [vmem:[#allocation3] sm:$0xff]
    %v40 = vld [vmem:[#allocation3 + $0x8] sm:$0xff]
    %v41 = vld [vmem:[#allocation3 + $0x10] sm:$0xff]
    %v42 = vld [vmem:[#allocation3 + $0x18] sm:$0xff]
    %v43 = vld [vmem:[#allocation3 + $0x20] sm:$0xff]
    %v44 = vld [vmem:[#allocation3 + $0x28] sm:$0xff]
    %v45 = vld [vmem:[#allocation3 + $0x30] sm:$0xff]
    %v46 = vld [vmem:[#allocation3 + $0x38] sm:$0xff]
    %v47 = vld [vmem:[#allocation3 + $0x40] sm:$0xff]
    %v48 = vld [vmem:[#allocation3 + $0x48] sm:$0xff]
    %v49 = vld [vmem:[#allocation3 + $0x50] sm:$0xff]
    %v50 = vld [vmem:[#allocation3 + $0x58] sm:$0xff]
    %v51 = vld [vmem:[#allocation3 + $0x60] sm:$0xff]
    %v52 = vld [vmem:[#allocation3 + $0x68] sm:$0xff]
    %v53 = vld [vmem:[#allocation3 + $0x70] sm:$0xff]
    %v54 = vld [vmem:[#allocation3 + $0x78] sm:$0xff]
    %v55 = vld [vmem:[#allocation3 + $0x80] sm:$0xff]
    %v56 = vld [vmem:[#allocation3 + $0x88] sm:$0xff]
    %v57 = vld [vmem:[#allocation3 + $0x90] sm:$0xff]
    %v58 = vld [vmem:[#allocation3 + $0x98] sm:$0xff]
    %v59 = vld [vmem:[#allocation3 + $0xa0] sm:$0xff]
    %v60 = vld [vmem:[#allocation3 + $0xa8] sm:$0xff]
    %v61 = vld [vmem:[#allocation3 + $0xb0] sm:$0xff]
    %v62 = vld [vmem:[#allocation3 + $0xb8] sm:$0xff]
    %v63 = vld [vmem:[#allocation3 + $0xc0] sm:$0xff]
    %v64 = vld [vmem:[#allocation3 + $0xc8] sm:$0xff]
    %v65 = vld [vmem:[#allocation3 + $0xd0] sm:$0xff]
    %v66 = vld [vmem:[#allocation3 + $0xd8] sm:$0xff]
    %v67 = vld [vmem:[#allocation3 + $0xe0] sm:$0xff]
    %v68 = vld [vmem:[#allocation3 + $0xe8] sm:$0xff]
    %v69 = vld [vmem:[#allocation3 + $0xf0] sm:$0xff]
    %v70 = vld [vmem:[#allocation3 + $0xf8] sm:$0xff]
    %v71 = vld [vmem:[%s4] sm:$0xf]
    %v72 = vld [vmem:[%s4 + $0x4] sm:$0xf]
    %v73 = vld [vmem:[%s4 + $0x8] sm:$0xf]
    %v74 = vld [vmem:[%s4 + $0xc] sm:$0xf]
    %v75 = vld [vmem:[%s4 + $0x10] sm:$0xf]
    %v76 = vld [vmem:[%s4 + $0x14] sm:$0xf]
    %v77 = vld [vmem:[%s4 + $0x18] sm:$0xf]
    %v78 = vld [vmem:[%s4 + $0x1c] sm:$0xf]
    %v79 = vld [vmem:[%s0] sm:$0xff]
    %v80 = vld [vmem:[%s0 + $0x8] sm:$0xff]
    %v81 = vld [vmem:[%s1] sm:$0xf]
    %83 = vset.pattern.permute.xlu0 0
    %84 = vperm.xlu0 %83, %v79
    %v85 = vpop.permute.xlu0 %84
    %88 = vset.pattern.permute.xlu0 0
    %89 = vperm.xlu0 %88, %v80
    %v90 = vpop.permute.xlu0 %89
    %v93 = vlaneseq
    %v94 = vshrl.u32 %v93, 7
    %v95 = vsub.s32 0, %v94
    %v96 = vrot.slane %v81, %v95
    %v97 = vlaneseq
    %v98 = vshrl.u32 %v97, 7
    %v99 = vsub.s32 1, %v98
    %v100 = vrot.slane %v81, %v99
    %v101 = vlaneseq
    %v102 = vshrl.u32 %v101, 7
    %v103 = vsub.s32 2, %v102
    %v104 = vrot.slane %v81, %v103
    %v105 = vlaneseq
    %v106 = vshrl.u32 %v105, 7
    %v107 = vsub.s32 3, %v106
    %v108 = vrot.slane %v81, %v107
    %v113 = vmul.f32 %v85, %v96
    %v114 = vmul.f32 %v85, %v100
    %v115 = vmul.f32 %v85, %v104
    %v116 = vmul.f32 %v85, %v108
    %v117 = vmul.f32 %v90, %v96
    %v118 = vmul.f32 %v90, %v100
    %v119 = vmul.f32 %v90, %v104
    %v120 = vmul.f32 %v90, %v108
    %v121 = vld [vmem:[%s2] sm:$0xf]
    %v123 = vlaneseq
    %v124 = vshrl.u32 %v123, 7
    %v125 = vsub.s32 0, %v124
    %v126 = vrot.slane %v121, %v125
    %v127 = vlaneseq
    %v128 = vshrl.u32 %v127, 7
    %v129 = vsub.s32 1, %v128
    %v130 = vrot.slane %v121, %v129
    %v131 = vlaneseq
    %v132 = vshrl.u32 %v131, 7
    %v133 = vsub.s32 2, %v132
    %v134 = vrot.slane %v121, %v133
    %v135 = vlaneseq
    %v136 = vshrl.u32 %v135, 7
    %v137 = vsub.s32 3, %v136
    %v138 = vrot.slane %v121, %v137
    %v143 = vadd.f32 %v113, %v126
    %v144 = vadd.f32 %v114, %v130
    %v145 = vadd.f32 %v115, %v134
    %v146 = vadd.f32 %v116, %v138
    %v147 = vadd.f32 %v117, %v126
    %v148 = vadd.f32 %v118, %v130
    %v149 = vadd.f32 %v119, %v134
    %v150 = vadd.f32 %v120, %v138
    %v151 = vxor.u32 %v143, 2147483648
    %v152 = vxor.u32 %v144, 2147483648
    %v153 = vxor.u32 %v147, 2147483648
    %v154 = vxor.u32 %v148, 2147483648
    %v155 = vmul.f32 %v151, 1.442695
    %v156 = vpow.pop %v155
    %v157 = vmul.f32 %v152, 1.442695
    %v158 = vpow.pop %v157
    %v159 = vmul.f32 %v153, 1.442695
    %v160 = vpow.pop %v159
    %v161 = vmul.f32 %v154, 1.442695
    %v162 = vpow.pop %v161
    %v163 = vadd.f32 %v156, 1.0
    %v164 = vadd.f32 %v158, 1.0
    %v165 = vadd.f32 %v160, 1.0
    %v166 = vadd.f32 %v162, 1.0
    %v167 = vrcp.pop %v163
    %v168 = vmul.f32 1.0, %v167
    %v169 = vrcp.pop %v164
    %v170 = vmul.f32 1.0, %v169
    %v171 = vrcp.pop %v165
    %v172 = vmul.f32 1.0, %v171
    %v173 = vrcp.pop %v166
    %v174 = vmul.f32 1.0, %v173
    %v175 = vmul.f32 %v170, 2.0
    %v176 = vmul.f32 %v174, 2.0
    %v177 = vsub.f32 %v175, 1.0
    %v178 = vsub.f32 %v176, 1.0
    %v179 = vmul.f32 %v168, 0.0
    %v180 = vmul.f32 %v172, 0.0
    %183 = vrot.lane.b32.xlu0 %v177, 64
    %v184 = vpop.permute.xlu0 %183
    %185 = vrot.lane.b32.xlu0 %v178, 64
    %v186 = vpop.permute.xlu0 %185
    %v189 = vmul.f32 %v168, %v184
    %v190 = vmul.f32 %v172, %v186
    %193 = vrot.lane.b32.xlu0 %v189, 64
    %v194 = vpop.permute.xlu0 %193
    %195 = vrot.lane.b32.xlu0 %v190, 64
    %v196 = vpop.permute.xlu0 %195
    %v199 = vadd.f32 %v179, %v194
    %v200 = vadd.f32 %v180, %v196
    %v201 = vtanh.pop %v199
    %v202 = vtanh.pop %v200
    %205 = vrot.lane.b32.xlu0 %v201, 64
    %v206 = vpop.permute.xlu0 %205
    %207 = vrot.lane.b32.xlu0 %v202, 64
    %v208 = vpop.permute.xlu0 %207
    %v211 = vmul.f32 %v170, %v206
    %v212 = vmul.f32 %v174, %v208
    %v215 = vrot.slane %v212, 7
    %vm216 = vcmask 1041409
    %v217 = vsel %vm216, %v215, %v211
    %vm219 = vcmask 517120
    %220 = vst.msk [vmem:[#allocation2] sm:$0x3] %vm219, %v217
    %vm221 = vcmask 1041920
    %222 = vst.msk [vmem:[#allocation2] sm:$0x3] %vm221, 0.0
    %v223 = vld [vmem:[#allocation2] sm:$0x3]
    %v224 = vpack.c.bf16 %v223, %v223
    %v257 = vunpack.c.l.b16 %v39
    %v258 = vunpack.c.h.b16 %v39
    %v259 = vunpack.c.l.b16 %v40
    %v260 = vunpack.c.h.b16 %v40
    %v261 = vunpack.c.l.b16 %v41
    %v262 = vunpack.c.h.b16 %v41
    %v263 = vunpack.c.l.b16 %v42
    %v264 = vunpack.c.h.b16 %v42
    %v265 = vunpack.c.l.b16 %v43
    %v266 = vunpack.c.h.b16 %v43
    %v267 = vunpack.c.l.b16 %v44
    %v268 = vunpack.c.h.b16 %v44
    %v269 = vunpack.c.l.b16 %v45
    %v270 = vunpack.c.h.b16 %v45
    %v271 = vunpack.c.l.b16 %v46
    %v272 = vunpack.c.h.b16 %v46
    %v273 = vunpack.c.l.b16 %v47
    %v274 = vunpack.c.h.b16 %v47
    %v275 = vunpack.c.l.b16 %v48
    %v276 = vunpack.c.h.b16 %v48
    %v277 = vunpack.c.l.b16 %v49
    %v278 = vunpack.c.h.b16 %v49
    %v279 = vunpack.c.l.b16 %v50
    %v280 = vunpack.c.h.b16 %v50
    %v281 = vunpack.c.l.b16 %v51
    %v282 = vunpack.c.h.b16 %v51
    %v283 = vunpack.c.l.b16 %v52
    %v284 = vunpack.c.h.b16 %v52
    %v285 = vunpack.c.l.b16 %v53
    %v286 = vunpack.c.h.b16 %v53
    %v287 = vunpack.c.l.b16 %v54
    %v288 = vunpack.c.h.b16 %v54
    %v289 = vunpack.c.l.b16 %v55
    %v290 = vunpack.c.h.b16 %v55
    %v291 = vunpack.c.l.b16 %v56
    %v292 = vunpack.c.h.b16 %v56
    %v293 = vunpack.c.l.b16 %v57
    %v294 = vunpack.c.h.b16 %v57
    %v295 = vunpack.c.l.b16 %v58
    %v296 = vunpack.c.h.b16 %v58
    %v297 = vunpack.c.l.b16 %v59
    %v298 = vunpack.c.h.b16 %v59
    %v299 = vunpack.c.l.b16 %v60
    %v300 = vunpack.c.h.b16 %v60
    %v301 = vunpack.c.l.b16 %v61
    %v302 = vunpack.c.h.b16 %v61
    %v303 = vunpack.c.l.b16 %v62
    %v304 = vunpack.c.h.b16 %v62
    %v305 = vunpack.c.l.b16 %v63
    %v306 = vunpack.c.h.b16 %v63
    %v307 = vunpack.c.l.b16 %v64
    %v308 = vunpack.c.h.b16 %v64
    %v309 = vunpack.c.l.b16 %v65
    %v310 = vunpack.c.h.b16 %v65
    %v311 = vunpack.c.l.b16 %v66
    %v312 = vunpack.c.h.b16 %v66
    %v313 = vunpack.c.l.b16 %v67
    %v314 = vunpack.c.h.b16 %v67
    %v315 = vunpack.c.l.b16 %v68
    %v316 = vunpack.c.h.b16 %v68
    %v317 = vunpack.c.l.b16 %v69
    %v318 = vunpack.c.h.b16 %v69
    %v319 = vunpack.c.l.b16 %v70
    %v320 = vunpack.c.h.b16 %v70
    %v321 = vpack.c.b16 %v261, %v257
    %v322 = vpack.c.b16 %v262, %v258
    %v323 = vpack.c.b16 %v263, %v259
    %v324 = vpack.c.b16 %v264, %v260
    %v325 = vpack.c.b16 %v269, %v265
    %v326 = vpack.c.b16 %v270, %v266
    %v327 = vpack.c.b16 %v271, %v267
    %v328 = vpack.c.b16 %v272, %v268
    %v329 = vpack.c.b16 %v277, %v273
    %v330 = vpack.c.b16 %v278, %v274
    %v331 = vpack.c.b16 %v279, %v275
    %v332 = vpack.c.b16 %v280, %v276
    %v333 = vpack.c.b16 %v285, %v281
    %v334 = vpack.c.b16 %v286, %v282
    %v335 = vpack.c.b16 %v287, %v283
    %v336 = vpack.c.b16 %v288, %v284
    %v337 = vpack.c.b16 %v293, %v289
    %v338 = vpack.c.b16 %v294, %v290
    %v339 = vpack.c.b16 %v295, %v291
    %v340 = vpack.c.b16 %v296, %v292
    %v341 = vpack.c.b16 %v301, %v297
    %v342 = vpack.c.b16 %v302, %v298
    %v343 = vpack.c.b16 %v303, %v299
    %v344 = vpack.c.b16 %v304, %v300
    %v345 = vpack.c.b16 %v309, %v305
    %v346 = vpack.c.b16 %v310, %v306
    %v347 = vpack.c.b16 %v311, %v307
    %v348 = vpack.c.b16 %v312, %v308
    %v349 = vpack.c.b16 %v317, %v313
    %v350 = vpack.c.b16 %v318, %v314
    %v351 = vpack.c.b16 %v319, %v315
    %v352 = vpack.c.b16 %v320, %v316
    %v393 = vrot.slane %v143, 1
    %v394 = vsel %vm216, %v147, %v393
    %v395 = vrot.slane %v144, 1
    %v396 = vsel %vm216, %v148, %v395
    %v397 = vrot.slane %v145, 1
    %v398 = vsel %vm216, %v149, %v397
    %v399 = vrot.slane %v146, 1
    %v400 = vsel %vm216, %v150, %v399
    %405 = vmatprep.subr.bf16.mxu0 %v322
    %406 = vmatpush1.bf16.msra.mxu0 %v321
    %407 = vmatprep.subr.bf16.mxu0 %v326
    %408 = vmatpush1.bf16.msra.mxu0 %v325
    %409 = vmatprep.subr.bf16.mxu0 %v330
    %410 = vmatpush1.bf16.msra.mxu0 %v329
    %411 = vmatprep.subr.bf16.mxu0 %v334
    %412 = vmatpush1.bf16.msra.mxu0 %v333
    %413 = vmatprep.subr.bf16.mxu0 %v338
    %414 = vmatpush1.bf16.msra.mxu0 %v337
    %415 = vmatprep.subr.bf16.mxu0 %v342
    %416 = vmatpush1.bf16.msra.mxu0 %v341
    %417 = vmatprep.subr.bf16.mxu0 %v346
    %418 = vmatpush1.bf16.msra.mxu0 %v345
    %419 = vmatprep.subr.bf16.mxu0 %v350
    %420 = vmatpush1.bf16.msra.mxu0 %v349
    %421 = vmatprep.subr.bf16.mxu0 0
    %422 = vmatpush1.bf16.msra.mxu0 0
    %423 = vmatprep.subr.bf16.mxu0 0
    %424 = vmatpush1.bf16.msra.mxu0 0
    %425 = vmatprep.subr.bf16.mxu0 0
    %426 = vmatpush1.bf16.msra.mxu0 0
    %427 = vmatprep.subr.bf16.mxu0 0
    %428 = vmatpush1.bf16.msra.mxu0 0
    %429 = vmatprep.subr.bf16.mxu0 0
    %430 = vmatpush1.bf16.msra.mxu0 0
    %431 = vmatprep.subr.bf16.mxu0 0
    %432 = vmatpush1.bf16.msra.mxu0 0
    %433 = vmatprep.subr.bf16.mxu0 0
    %434 = vmatpush1.bf16.msra.mxu0 0
    %435 = vmatprep.subr.bf16.mxu0 0
    %436 = vmatpush1.bf16.msra.mxu0 0
    %437 = vmatprep.mubr.bf16.mxu0 0
    %438 = vmatmul.mubr.bf16.gmra.mrb[0].mxu0 %v224
    %v439 = vpop.f32.mrb[0].mxu0
    %v440 = vadd.f32 %v394, %v439
    %v441 = vpop.f32.mrb[0].mxu0
    %v442 = vadd.f32 %v396, %v441
    %v443 = vpop.f32.mrb[0].mxu0
    %v444 = vpop.f32.mrb[0].mxu0
    %445 = vdwg.mxu0
    %446 = vmatprep.subr.bf16.mxu0 %v324
    %447 = vmatpush1.bf16.msra.mxu0 %v323
    %448 = vmatprep.subr.bf16.mxu0 %v328
    %449 = vmatpush1.bf16.msra.mxu0 %v327
    %450 = vmatprep.subr.bf16.mxu0 %v332
    %451 = vmatpush1.bf16.msra.mxu0 %v331
    %452 = vmatprep.subr.bf16.mxu0 %v336
    %453 = vmatpush1.bf16.msra.mxu0 %v335
    %454 = vmatprep.subr.bf16.mxu0 %v340
    %455 = vmatpush1.bf16.msra.mxu0 %v339
    %456 = vmatprep.subr.bf16.mxu0 %v344
    %457 = vmatpush1.bf16.msra.mxu0 %v343
    %458 = vmatprep.subr.bf16.mxu0 %v348
    %459 = vmatpush1.bf16.msra.mxu0 %v347
    %460 = vmatprep.subr.bf16.mxu0 %v352
    %461 = vmatpush1.bf16.msra.mxu0 %v351
    %462 = vmatprep.subr.bf16.mxu0 0
    %463 = vmatpush1.bf16.msra.mxu0 0
    %464 = vmatprep.subr.bf16.mxu0 0
    %465 = vmatpush1.bf16.msra.mxu0 0
    %466 = vmatprep.subr.bf16.mxu0 0
    %467 = vmatpush1.bf16.msra.mxu0 0
    %468 = vmatprep.subr.bf16.mxu0 0
    %469 = vmatpush1.bf16.msra.mxu0 0
    %470 = vmatprep.subr.bf16.mxu0 0
    %471 = vmatpush1.bf16.msra.mxu0 0
    %472 = vmatprep.subr.bf16.mxu0 0
    %473 = vmatpush1.bf16.msra.mxu0 0
    %474 = vmatprep.subr.bf16.mxu0 0
    %475 = vmatpush1.bf16.msra.mxu0 0
    %476 = vmatprep.subr.bf16.mxu0 0
    %477 = vmatpush1.bf16.msra.mxu0 0
    %478 = vmatprep.mubr.bf16.mxu0 0
    %479 = vmatmul.mubr.bf16.gmra.mrb[0].mxu0 %v224
    %v480 = vpop.f32.mrb[0].mxu0
    %v481 = vadd.f32 %v398, %v480
    %v482 = vpop.f32.mrb[0].mxu0
    %v483 = vadd.f32 %v400, %v482
    %v484 = vpop.f32.mrb[0].mxu0
    %v485 = vpop.f32.mrb[0].mxu0
    %486 = vdwg.mxu0
    %v487 = vxor.u32 %v440, 2147483648
    %v488 = vxor.u32 %v442, 2147483648
    %v489 = vxor.u32 %v481, 2147483648
    %v490 = vxor.u32 %v483, 2147483648
    %v491 = vmul.f32 %v487, 1.442695
    %v492 = vpow.pop %v491
    %v493 = vmul.f32 %v488, 1.442695
    %v494 = vpow.pop %v493
    %v495 = vmul.f32 %v489, 1.442695
    %v496 = vpow.pop %v495
    %v497 = vmul.f32 %v490, 1.442695
    %v498 = vpow.pop %v497
    %v499 = vadd.f32 %v492, 1.0
    %v500 = vadd.f32 %v494, 1.0
    %v501 = vadd.f32 %v496, 1.0
    %v502 = vadd.f32 %v498, 1.0
    %v503 = vrcp.pop %v499
    %v504 = vmul.f32 1.0, %v503
    %v505 = vrcp.pop %v500
    %v506 = vmul.f32 1.0, %v505
    %v507 = vrcp.pop %v501
    %v508 = vmul.f32 1.0, %v507
    %v509 = vrcp.pop %v502
    %v510 = vmul.f32 1.0, %v509
    %v511 = vmul.f32 %v510, 2.0
    %v512 = vsub.f32 %v511, 1.0
    %v513 = vmul.f32 %v508, 0.0
    %515 = vrot.lane.b32.xlu0 %v512, 64
    %v516 = vpop.permute.xlu0 %515
    %v518 = vmul.f32 %v508, %v516
    %520 = vrot.lane.b32.xlu0 %v518, 64
    %v521 = vpop.permute.xlu0 %520
    %v523 = vadd.f32 %v513, %v521
    %v524 = vtanh.pop %v523
    %526 = vrot.lane.b32.xlu0 %v524, 64
    %v527 = vpop.permute.xlu0 %526
    %v529 = vmul.f32 %v510, %v527
    %531 = vrot.lane.b32.xlu0 %v529, 64
    %v532 = vpop.permute.xlu0 %531
    %534 = vst.msk [vmem:[#allocation2] sm:$0x3] %vm221, %v532
    %v535 = vmul.f32 %v506, 2.0
    %v536 = vsub.f32 %v535, 1.0
    %v539 = vrot.slane %v200, 7
    %v540 = vsel %vm216, %v539, %v199
    %v542 = vmul.f32 %v504, %v540
    %544 = vrot.lane.b32.xlu0 %v536, 64
    %v545 = vpop.permute.xlu0 %544
    %v547 = vmul.f32 %v504, %v545
    %549 = vrot.lane.b32.xlu0 %v547, 64
    %v550 = vpop.permute.xlu0 %549
    %v552 = vadd.f32 %v542, %v550
    %v553 = vtanh.pop %v552
    %555 = vrot.lane.b32.xlu0 %v553, 64
    %v556 = vpop.permute.xlu0 %555
    %v558 = vmul.f32 %v506, %v556
    %559 = vst.msk [vmem:[#allocation2] sm:$0x3] %vm219, %v558
    %v560 = vld [vmem:[#allocation2] sm:$0x3]
    %v561 = vpack.c.bf16 %v560, %v560
    %v562 = vrot.slane %v143, 2
    %v563 = vrot.slane %v147, 1
    %v564 = vsel %vm216, %v563, %v562
    %v565 = vrot.slane %v144, 2
    %v566 = vrot.slane %v148, 1
    %v567 = vsel %vm216, %v566, %v565
    %v568 = vrot.slane %v145, 2
    %v569 = vrot.slane %v149, 1
    %v570 = vsel %vm216, %v569, %v568
    %v571 = vrot.slane %v146, 2
    %v572 = vrot.slane %v150, 1
    %v573 = vsel %vm216, %v572, %v571
    %578 = vmatprep.subr.bf16.mxu0 %v322
    %579 = vmatpush1.bf16.msra.mxu0 %v321
    %580 = vmatprep.subr.bf16.mxu0 %v326
    %581 = vmatpush1.bf16.msra.mxu0 %v325
    %582 = vmatprep.subr.bf16.mxu0 %v330
    %583 = vmatpush1.bf16.msra.mxu0 %v329
    %584 = vmatprep.subr.bf16.mxu0 %v334
    %585 = vmatpush1.bf16.msra.mxu0 %v333
    %586 = vmatprep.subr.bf16.mxu0 %v338
    %587 = vmatpush1.bf16.msra.mxu0 %v337
    %588 = vmatprep.subr.bf16.mxu0 %v342
    %589 = vmatpush1.bf16.msra.mxu0 %v341
    %590 = vmatprep.subr.bf16.mxu0 %v346
    %591 = vmatpush1.bf16.msra.mxu0 %v345
    %592 = vmatprep.subr.bf16.mxu0 %v350
    %593 = vmatpush1.bf16.msra.mxu0 %v349
    %594 = vmatprep.subr.bf16.mxu0 0
    %595 = vmatpush1.bf16.msra.mxu0 0
    %596 = vmatprep.subr.bf16.mxu0 0
    %597 = vmatpush1.bf16.msra.mxu0 0
    %598 = vmatprep.subr.bf16.mxu0 0
    %599 = vmatpush1.bf16.msra.mxu0 0
    %600 = vmatprep.subr.bf16.mxu0 0
    %601 = vmatpush1.bf16.msra.mxu0 0
    %602 = vmatprep.subr.bf16.mxu0 0
    %603 = vmatpush1.bf16.msra.mxu0 0
    %604 = vmatprep.subr.bf16.mxu0 0
    %605 = vmatpush1.bf16.msra.mxu0 0
    %606 = vmatprep.subr.bf16.mxu0 0
    %607 = vmatpush1.bf16.msra.mxu0 0
    %608 = vmatprep.subr.bf16.mxu0 0
    %609 = vmatpush1.bf16.msra.mxu0 0
    %610 = vmatprep.mubr.bf16.mxu0 0
    %611 = vmatmul.mubr.bf16.gmra.mrb[0].mxu0 %v561
    %v612 = vpop.f32.mrb[0].mxu0
    %v613 = vadd.f32 %v564, %v612
    %v614 = vpop.f32.mrb[0].mxu0
    %v615 = vadd.f32 %v567, %v614
    %v616 = vpop.f32.mrb[0].mxu0
    %v617 = vpop.f32.mrb[0].mxu0
    %618 = vdwg.mxu0
    %619 = vmatprep.subr.bf16.mxu0 %v324
    %620 = vmatpush1.bf16.msra.mxu0 %v323
    %621 = vmatprep.subr.bf16.mxu0 %v328
    %622 = vmatpush1.bf16.msra.mxu0 %v327
    %623 = vmatprep.subr.bf16.mxu0 %v332
    %624 = vmatpush1.bf16.msra.mxu0 %v331
    %625 = vmatprep.subr.bf16.mxu0 %v336
    %626 = vmatpush1.bf16.msra.mxu0 %v335
    %627 = vmatprep.subr.bf16.mxu0 %v340
    %628 = vmatpush1.bf16.msra.mxu0 %v339
    %629 = vmatprep.subr.bf16.mxu0 %v344
    %630 = vmatpush1.bf16.msra.mxu0 %v343
    %631 = vmatprep.subr.bf16.mxu0 %v348
    %632 = vmatpush1.bf16.msra.mxu0 %v347
    %633 = vmatprep.subr.bf16.mxu0 %v352
    %634 = vmatpush1.bf16.msra.mxu0 %v351
    %635 = vmatprep.subr.bf16.mxu0 0
    %636 = vmatpush1.bf16.msra.mxu0 0
    %637 = vmatprep.subr.bf16.mxu0 0
    %638 = vmatpush1.bf16.msra.mxu0 0
    %639 = vmatprep.subr.bf16.mxu0 0
    %640 = vmatpush1.bf16.msra.mxu0 0
    %641 = vmatprep.subr.bf16.mxu0 0
    %642 = vmatpush1.bf16.msra.mxu0 0
    %643 = vmatprep.subr.bf16.mxu0 0
    %644 = vmatpush1.bf16.msra.mxu0 0
    %645 = vmatprep.subr.bf16.mxu0 0
    %646 = vmatpush1.bf16.msra.mxu0 0
    %647 = vmatprep.subr.bf16.mxu0 0
    %648 = vmatpush1.bf16.msra.mxu0 0
    %649 = vmatprep.subr.bf16.mxu0 0
    %650 = vmatpush1.bf16.msra.mxu0 0
    %651 = vmatprep.mubr.bf16.mxu0 0
    %652 = vmatmul.mubr.bf16.gmra.mrb[0].mxu0 %v561
    %v653 = vpop.f32.mrb[0].mxu0
    %v654 = vadd.f32 %v570, %v653
    %v655 = vpop.f32.mrb[0].mxu0
    %v656 = vadd.f32 %v573, %v655
    %v657 = vpop.f32.mrb[0].mxu0
    %v658 = vpop.f32.mrb[0].mxu0
    %659 = vdwg.mxu0
    %v660 = vxor.u32 %v613, 2147483648
    %v661 = vxor.u32 %v615, 2147483648
    %v662 = vxor.u32 %v654, 2147483648
    %v663 = vxor.u32 %v656, 2147483648
    %v664 = vmul.f32 %v660, 1.442695
    %v665 = vpow.pop %v664
    %v666 = vmul.f32 %v661, 1.442695
    %v667 = vpow.pop %v666
    %v668 = vmul.f32 %v662, 1.442695
    %v669 = vpow.pop %v668
    %v670 = vmul.f32 %v663, 1.442695
    %v671 = vpow.pop %v670
    %v672 = vadd.f32 %v665, 1.0
    %v673 = vadd.f32 %v667, 1.0
    %v674 = vadd.f32 %v669, 1.0
    %v675 = vadd.f32 %v671, 1.0
    %v676 = vrcp.pop %v672
    %v677 = vmul.f32 1.0, %v676
    %v678 = vrcp.pop %v673
    %v679 = vmul.f32 1.0, %v678
    %v680 = vrcp.pop %v674
    %v681 = vmul.f32 1.0, %v680
    %v682 = vrcp.pop %v675
    %v683 = vmul.f32 1.0, %v682
    %v684 = vmul.f32 %v683, 2.0
    %v685 = vsub.f32 %v684, 1.0
    %v686 = vmul.f32 %v681, %v523
    %688 = vrot.lane.b32.xlu0 %v685, 64
    %v689 = vpop.permute.xlu0 %688
    %v691 = vmul.f32 %v681, %v689
    %693 = vrot.lane.b32.xlu0 %v691, 64
    %v694 = vpop.permute.xlu0 %693
    %v696 = vadd.f32 %v686, %v694
    %v697 = vtanh.pop %v696
    %699 = vrot.lane.b32.xlu0 %v697, 64
    %v700 = vpop.permute.xlu0 %699
    %v702 = vmul.f32 %v683, %v700
    %704 = vrot.lane.b32.xlu0 %v702, 64
    %v705 = vpop.permute.xlu0 %704
    %707 = vst.msk [vmem:[#allocation2] sm:$0x3] %vm221, %v705
    %v708 = vmul.f32 %v679, 2.0
    %v709 = vsub.f32 %v708, 1.0
    %v710 = vmul.f32 %v677, %v552
    %712 = vrot.lane.b32.xlu0 %v709, 64
    %v713 = vpop.permute.xlu0 %712
    %v715 = vmul.f32 %v677, %v713
    %717 = vrot.lane.b32.xlu0 %v715, 64
    %v718 = vpop.permute.xlu0 %717
    %v720 = vadd.f32 %v710, %v718
    %v721 = vtanh.pop %v720
    %723 = vrot.lane.b32.xlu0 %v721, 64
    %v724 = vpop.permute.xlu0 %723
    %v726 = vmul.f32 %v679, %v724
    %727 = vst.msk [vmem:[#allocation2] sm:$0x3] %vm219, %v726
    %v728 = vld [vmem:[#allocation2] sm:$0x3]
    %v729 = vpack.c.bf16 %v728, %v728
    %v730 = vrot.slane %v143, 3
    %v731 = vrot.slane %v147, 2
    %v732 = vsel %vm216, %v731, %v730
    %v733 = vrot.slane %v144, 3
    %v734 = vrot.slane %v148, 2
    %v735 = vsel %vm216, %v734, %v733
    %v736 = vrot.slane %v145, 3
    %v737 = vrot.slane %v149, 2
    %v738 = vsel %vm216, %v737, %v736
    %v739 = vrot.slane %v146, 3
    %v740 = vrot.slane %v150, 2
    %v741 = vsel %vm216, %v740, %v739
    %746 = vmatprep.subr.bf16.mxu0 %v322
    %747 = vmatpush1.bf16.msra.mxu0 %v321
    %748 = vmatprep.subr.bf16.mxu0 %v326
    %749 = vmatpush1.bf16.msra.mxu0 %v325
    %750 = vmatprep.subr.bf16.mxu0 %v330
    %751 = vmatpush1.bf16.msra.mxu0 %v329
    %752 = vmatprep.subr.bf16.mxu0 %v334
    %753 = vmatpush1.bf16.msra.mxu0 %v333
    %754 = vmatprep.subr.bf16.mxu0 %v338
    %755 = vmatpush1.bf16.msra.mxu0 %v337
    %756 = vmatprep.subr.bf16.mxu0 %v342
    %757 = vmatpush1.bf16.msra.mxu0 %v341
    %758 = vmatprep.subr.bf16.mxu0 %v346
    %759 = vmatpush1.bf16.msra.mxu0 %v345
    %760 = vmatprep.subr.bf16.mxu0 %v350
    %761 = vmatpush1.bf16.msra.mxu0 %v349
    %762 = vmatprep.subr.bf16.mxu0 0
    %763 = vmatpush1.bf16.msra.mxu0 0
    %764 = vmatprep.subr.bf16.mxu0 0
    %765 = vmatpush1.bf16.msra.mxu0 0
    %766 = vmatprep.subr.bf16.mxu0 0
    %767 = vmatpush1.bf16.msra.mxu0 0
    %768 = vmatprep.subr.bf16.mxu0 0
    %769 = vmatpush1.bf16.msra.mxu0 0
    %770 = vmatprep.subr.bf16.mxu0 0
    %771 = vmatpush1.bf16.msra.mxu0 0
    %772 = vmatprep.subr.bf16.mxu0 0
    %773 = vmatpush1.bf16.msra.mxu0 0
    %774 = vmatprep.subr.bf16.mxu0 0
    %775 = vmatpush1.bf16.msra.mxu0 0
    %776 = vmatprep.subr.bf16.mxu0 0
    %777 = vmatpush1.bf16.msra.mxu0 0
    %778 = vmatprep.mubr.bf16.mxu0 0
    %779 = vmatmul.mubr.bf16.gmra.mrb[0].mxu0 %v729
    %v780 = vpop.f32.mrb[0].mxu0
    %v781 = vadd.f32 %v732, %v780
    %v782 = vpop.f32.mrb[0].mxu0
    %v783 = vadd.f32 %v735, %v782
    %v784 = vpop.f32.mrb[0].mxu0
    %v785 = vpop.f32.mrb[0].mxu0
    %786 = vdwg.mxu0
    %787 = vmatprep.subr.bf16.mxu0 %v324
    %788 = vmatpush1.bf16.msra.mxu0 %v323
    %789 = vmatprep.subr.bf16.mxu0 %v328
    %790 = vmatpush1.bf16.msra.mxu0 %v327
    %791 = vmatprep.subr.bf16.mxu0 %v332
    %792 = vmatpush1.bf16.msra.mxu0 %v331
    %793 = vmatprep.subr.bf16.mxu0 %v336
    %794 = vmatpush1.bf16.msra.mxu0 %v335
    %795 = vmatprep.subr.bf16.mxu0 %v340
    %796 = vmatpush1.bf16.msra.mxu0 %v339
    %797 = vmatprep.subr.bf16.mxu0 %v344
    %798 = vmatpush1.bf16.msra.mxu0 %v343
    %799 = vmatprep.subr.bf16.mxu0 %v348
    %800 = vmatpush1.bf16.msra.mxu0 %v347
    %801 = vmatprep.subr.bf16.mxu0 %v352
    %802 = vmatpush1.bf16.msra.mxu0 %v351
    %803 = vmatprep.subr.bf16.mxu0 0
    %804 = vmatpush1.bf16.msra.mxu0 0
    %805 = vmatprep.subr.bf16.mxu0 0
    %806 = vmatpush1.bf16.msra.mxu0 0
    %807 = vmatprep.subr.bf16.mxu0 0
    %808 = vmatpush1.bf16.msra.mxu0 0
    %809 = vmatprep.subr.bf16.mxu0 0
    %810 = vmatpush1.bf16.msra.mxu0 0
    %811 = vmatprep.subr.bf16.mxu0 0
    %812 = vmatpush1.bf16.msra.mxu0 0
    %813 = vmatprep.subr.bf16.mxu0 0
    %814 = vmatpush1.bf16.msra.mxu0 0
    %815 = vmatprep.subr.bf16.mxu0 0
    %816 = vmatpush1.bf16.msra.mxu0 0
    %817 = vmatprep.subr.bf16.mxu0 0
    %818 = vmatpush1.bf16.msra.mxu0 0
    %819 = vmatprep.mubr.bf16.mxu0 0
    %820 = vmatmul.mubr.bf16.gmra.mrb[0].mxu0 %v729
    %v821 = vpop.f32.mrb[0].mxu0
    %v822 = vadd.f32 %v738, %v821
    %v823 = vpop.f32.mrb[0].mxu0
    %v824 = vadd.f32 %v741, %v823
    %v825 = vpop.f32.mrb[0].mxu0
    %v826 = vpop.f32.mrb[0].mxu0
    %827 = vdwg.mxu0
    %v828 = vxor.u32 %v781, 2147483648
    %v829 = vxor.u32 %v783, 2147483648
    %v830 = vxor.u32 %v822, 2147483648
    %v831 = vxor.u32 %v824, 2147483648
    %v832 = vmul.f32 %v828, 1.442695
    %v833 = vpow.pop %v832
    %v834 = vmul.f32 %v829, 1.442695
    %v835 = vpow.pop %v834
    %v836 = vmul.f32 %v830, 1.442695
    %v837 = vpow.pop %v836
    %v838 = vmul.f32 %v831, 1.442695
    %v839 = vpow.pop %v838
    %v840 = vadd.f32 %v833, 1.0
    %v841 = vadd.f32 %v835, 1.0
    %v842 = vadd.f32 %v837, 1.0
    %v843 = vadd.f32 %v839, 1.0
    %v844 = vrcp.pop %v840
    %v845 = vmul.f32 1.0, %v844
    %v846 = vrcp.pop %v841
    %v847 = vmul.f32 1.0, %v846
    %v848 = vrcp.pop %v842
    %v849 = vmul.f32 1.0, %v848
    %v850 = vrcp.pop %v843
    %v851 = vmul.f32 1.0, %v850
    %v852 = vmul.f32 %v851, 2.0
    %v853 = vsub.f32 %v852, 1.0
    %v854 = vmul.f32 %v849, %v696
    %856 = vrot.lane.b32.xlu0 %v853, 64
    %v857 = vpop.permute.xlu0 %856
    %v859 = vmul.f32 %v849, %v857
    %861 = vrot.lane.b32.xlu0 %v859, 64
    %v862 = vpop.permute.xlu0 %861
    %v864 = vadd.f32 %v854, %v862
    %v865 = vtanh.pop %v864
    %867 = vrot.lane.b32.xlu0 %v865, 64
    %v868 = vpop.permute.xlu0 %867
    %v870 = vmul.f32 %v851, %v868
    %872 = vrot.lane.b32.xlu0 %v870, 64
    %v873 = vpop.permute.xlu0 %872
    %875 = vst.msk [vmem:[#allocation2] sm:$0x3] %vm221, %v873
    %v876 = vmul.f32 %v847, 2.0
    %v877 = vsub.f32 %v876, 1.0
    %v878 = vmul.f32 %v845, %v720
    %880 = vrot.lane.b32.xlu0 %v877, 64
    %v881 = vpop.permute.xlu0 %880
    %v883 = vmul.f32 %v845, %v881
    %885 = vrot.lane.b32.xlu0 %v883, 64
    %v886 = vpop.permute.xlu0 %885
    %v888 = vadd.f32 %v878, %v886
    %v889 = vtanh.pop %v888
    %891 = vrot.lane.b32.xlu0 %v889, 64
    %v892 = vpop.permute.xlu0 %891
    %v894 = vmul.f32 %v847, %v892
    %895 = vst.msk [vmem:[#allocation2] sm:$0x3] %vm219, %v894
    %v896 = vld [vmem:[#allocation2] sm:$0x3]
    %v897 = vpack.c.bf16 %v896, %v896
    %v898 = vrot.slane %v143, 4
    %v899 = vrot.slane %v147, 3
    %v900 = vsel %vm216, %v899, %v898
    %v901 = vrot.slane %v144, 4
    %v902 = vrot.slane %v148, 3
    %v903 = vsel %vm216, %v902, %v901
    %v904 = vrot.slane %v145, 4
    %v905 = vrot.slane %v149, 3
    %v906 = vsel %vm216, %v905, %v904
    %v907 = vrot.slane %v146, 4
    %v908 = vrot.slane %v150, 3
    %v909 = vsel %vm216, %v908, %v907
    %914 = vmatprep.subr.bf16.mxu0 %v322
    %915 = vmatpush1.bf16.msra.mxu0 %v321
    %916 = vmatprep.subr.bf16.mxu0 %v326
    %917 = vmatpush1.bf16.msra.mxu0 %v325
    %918 = vmatprep.subr.bf16.mxu0 %v330
    %919 = vmatpush1.bf16.msra.mxu0 %v329
    %920 = vmatprep.subr.bf16.mxu0 %v334
    %921 = vmatpush1.bf16.msra.mxu0 %v333
    %922 = vmatprep.subr.bf16.mxu0 %v338
    %923 = vmatpush1.bf16.msra.mxu0 %v337
    %924 = vmatprep.subr.bf16.mxu0 %v342
    %925 = vmatpush1.bf16.msra.mxu0 %v341
    %926 = vmatprep.subr.bf16.mxu0 %v346
    %927 = vmatpush1.bf16.msra.mxu0 %v345
    %928 = vmatprep.subr.bf16.mxu0 %v350
    %929 = vmatpush1.bf16.msra.mxu0 %v349
    %930 = vmatprep.subr.bf16.mxu0 0
    %931 = vmatpush1.bf16.msra.mxu0 0
    %932 = vmatprep.subr.bf16.mxu0 0
    %933 = vmatpush1.bf16.msra.mxu0 0
    %934 = vmatprep.subr.bf16.mxu0 0
    %935 = vmatpush1.bf16.msra.mxu0 0
    %936 = vmatprep.subr.bf16.mxu0 0
    %937 = vmatpush1.bf16.msra.mxu0 0
    %938 = vmatprep.subr.bf16.mxu0 0
    %939 = vmatpush1.bf16.msra.mxu0 0
    %940 = vmatprep.subr.bf16.mxu0 0
    %941 = vmatpush1.bf16.msra.mxu0 0
    %942 = vmatprep.subr.bf16.mxu0 0
    %943 = vmatpush1.bf16.msra.mxu0 0
    %944 = vmatprep.subr.bf16.mxu0 0
    %945 = vmatpush1.bf16.msra.mxu0 0
    %946 = vmatprep.mubr.bf16.mxu0 0
    %947 = vmatmul.mubr.bf16.gmra.mrb[0].mxu0 %v897
    %v948 = vpop.f32.mrb[0].mxu0
    %v949 = vadd.f32 %v900, %v948
    %v950 = vpop.f32.mrb[0].mxu0
    %v951 = vadd.f32 %v903, %v950
    %v952 = vpop.f32.mrb[0].mxu0
    %v953 = vpop.f32.mrb[0].mxu0
    %954 = vdwg.mxu0
    %955 = vmatprep.subr.bf16.mxu0 %v324
    %956 = vmatpush1.bf16.msra.mxu0 %v323
    %957 = vmatprep.subr.bf16.mxu0 %v328
    %958 = vmatpush1.bf16.msra.mxu0 %v327
    %959 = vmatprep.subr.bf16.mxu0 %v332
    %960 = vmatpush1.bf16.msra.mxu0 %v331
    %961 = vmatprep.subr.bf16.mxu0 %v336
    %962 = vmatpush1.bf16.msra.mxu0 %v335
    %963 = vmatprep.subr.bf16.mxu0 %v340
    %964 = vmatpush1.bf16.msra.mxu0 %v339
    %965 = vmatprep.subr.bf16.mxu0 %v344
    %966 = vmatpush1.bf16.msra.mxu0 %v343
    %967 = vmatprep.subr.bf16.mxu0 %v348
    %968 = vmatpush1.bf16.msra.mxu0 %v347
    %969 = vmatprep.subr.bf16.mxu0 %v352
    %970 = vmatpush1.bf16.msra.mxu0 %v351
    %971 = vmatprep.subr.bf16.mxu0 0
    %972 = vmatpush1.bf16.msra.mxu0 0
    %973 = vmatprep.subr.bf16.mxu0 0
    %974 = vmatpush1.bf16.msra.mxu0 0
    %975 = vmatprep.subr.bf16.mxu0 0
    %976 = vmatpush1.bf16.msra.mxu0 0
    %977 = vmatprep.subr.bf16.mxu0 0
    %978 = vmatpush1.bf16.msra.mxu0 0
    %979 = vmatprep.subr.bf16.mxu0 0
    %980 = vmatpush1.bf16.msra.mxu0 0
    %981 = vmatprep.subr.bf16.mxu0 0
    %982 = vmatpush1.bf16.msra.mxu0 0
    %983 = vmatprep.subr.bf16.mxu0 0
    %984 = vmatpush1.bf16.msra.mxu0 0
    %985 = vmatprep.subr.bf16.mxu0 0
    %986 = vmatpush1.bf16.msra.mxu0 0
    %987 = vmatprep.mubr.bf16.mxu0 0
    %988 = vmatmul.mubr.bf16.gmra.mrb[0].mxu0 %v897
    %v989 = vpop.f32.mrb[0].mxu0
    %v990 = vadd.f32 %v906, %v989
    %v991 = vpop.f32.mrb[0].mxu0
    %v992 = vadd.f32 %v909, %v991
    %v993 = vpop.f32.mrb[0].mxu0
    %v994 = vpop.f32.mrb[0].mxu0
    %995 = vdwg.mxu0
    %v996 = vxor.u32 %v949, 2147483648
    %v997 = vxor.u32 %v951, 2147483648
    %v998 = vxor.u32 %v990, 2147483648
    %v999 = vxor.u32 %v992, 2147483648
    %v1000 = vmul.f32 %v996, 1.442695
    %v1001 = vpow.pop %v1000
    %v1002 = vmul.f32 %v997, 1.442695
    %v1003 = vpow.pop %v1002
    %v1004 = vmul.f32 %v998, 1.442695
    %v1005 = vpow.pop %v1004
    %v1006 = vmul.f32 %v999, 1.442695
    %v1007 = vpow.pop %v1006
    %v1008 = vadd.f32 %v1001, 1.0
    %v1009 = vadd.f32 %v1003, 1.0
    %v1010 = vadd.f32 %v1005, 1.0
    %v1011 = vadd.f32 %v1007, 1.0
    %v1012 = vrcp.pop %v1008
    %v1013 = vmul.f32 1.0, %v1012
    %v1014 = vrcp.pop %v1009
    %v1015 = vmul.f32 1.0, %v1014
    %v1016 = vrcp.pop %v1010
    %v1017 = vmul.f32 1.0, %v1016
    %v1018 = vrcp.pop %v1011
    %v1019 = vmul.f32 1.0, %v1018
    %v1020 = vmul.f32 %v1019, 2.0
    %v1021 = vsub.f32 %v1020, 1.0
    %v1022 = vmul.f32 %v1017, %v864
    %1024 = vrot.lane.b32.xlu0 %v1021, 64
    %v1025 = vpop.permute.xlu0 %1024
    %v1027 = vmul.f32 %v1017, %v1025
    %1029 = vrot.lane.b32.xlu0 %v1027, 64
    %v1030 = vpop.permute.xlu0 %1029
    %v1032 = vadd.f32 %v1022, %v1030
    %v1033 = vtanh.pop %v1032
    %1035 = vrot.lane.b32.xlu0 %v1033, 64
    %v1036 = vpop.permute.xlu0 %1035
    %v1038 = vmul.f32 %v1019, %v1036
    %1040 = vrot.lane.b32.xlu0 %v1038, 64
    %v1041 = vpop.permute.xlu0 %1040
    %1043 = vst.msk [vmem:[#allocation2] sm:$0x3] %vm221, %v1041
    %v1044 = vmul.f32 %v1015, 2.0
    %v1045 = vsub.f32 %v1044, 1.0
    %v1046 = vmul.f32 %v1013, %v888
    %1048 = vrot.lane.b32.xlu0 %v1045, 64
    %v1049 = vpop.permute.xlu0 %1048
    %v1051 = vmul.f32 %v1013, %v1049
    %1053 = vrot.lane.b32.xlu0 %v1051, 64
    %v1054 = vpop.permute.xlu0 %1053
    %v1056 = vadd.f32 %v1046, %v1054
    %v1057 = vtanh.pop %v1056
    %1059 = vrot.lane.b32.xlu0 %v1057, 64
    %v1060 = vpop.permute.xlu0 %1059
    %v1062 = vmul.f32 %v1015, %v1060
    %1063 = vst.msk [vmem:[#allocation2] sm:$0x3] %vm219, %v1062
    %v1064 = vld [vmem:[#allocation2] sm:$0x3]
    %v1065 = vpack.c.bf16 %v1064, %v1064
    %v1066 = vrot.slane %v143, 5
    %v1067 = vrot.slane %v147, 4
    %v1068 = vsel %vm216, %v1067, %v1066
    %v1069 = vrot.slane %v144, 5
    %v1070 = vrot.slane %v148, 4
    %v1071 = vsel %vm216, %v1070, %v1069
    %v1072 = vrot.slane %v145, 5
    %v1073 = vrot.slane %v149, 4
    %v1074 = vsel %vm216, %v1073, %v1072
    %v1075 = vrot.slane %v146, 5
    %v1076 = vrot.slane %v150, 4
    %v1077 = vsel %vm216, %v1076, %v1075
    %1082 = vmatprep.subr.bf16.mxu0 %v322
    %1083 = vmatpush1.bf16.msra.mxu0 %v321
    %1084 = vmatprep.subr.bf16.mxu0 %v326
    %1085 = vmatpush1.bf16.msra.mxu0 %v325
    %1086 = vmatprep.subr.bf16.mxu0 %v330
    %1087 = vmatpush1.bf16.msra.mxu0 %v329
    %1088 = vmatprep.subr.bf16.mxu0 %v334
    %1089 = vmatpush1.bf16.msra.mxu0 %v333
    %1090 = vmatprep.subr.bf16.mxu0 %v338
    %1091 = vmatpush1.bf16.msra.mxu0 %v337
    %1092 = vmatprep.subr.bf16.mxu0 %v342
    %1093 = vmatpush1.bf16.msra.mxu0 %v341
    %1094 = vmatprep.subr.bf16.mxu0 %v346
    %1095 = vmatpush1.bf16.msra.mxu0 %v345
    %1096 = vmatprep.subr.bf16.mxu0 %v350
    %1097 = vmatpush1.bf16.msra.mxu0 %v349
    %1098 = vmatprep.subr.bf16.mxu0 0
    %1099 = vmatpush1.bf16.msra.mxu0 0
    %1100 = vmatprep.subr.bf16.mxu0 0
    %1101 = vmatpush1.bf16.msra.mxu0 0
    %1102 = vmatprep.subr.bf16.mxu0 0
    %1103 = vmatpush1.bf16.msra.mxu0 0
    %1104 = vmatprep.subr.bf16.mxu0 0
    %1105 = vmatpush1.bf16.msra.mxu0 0
    %1106 = vmatprep.subr.bf16.mxu0 0
    %1107 = vmatpush1.bf16.msra.mxu0 0
    %1108 = vmatprep.subr.bf16.mxu0 0
    %1109 = vmatpush1.bf16.msra.mxu0 0
    %1110 = vmatprep.subr.bf16.mxu0 0
    %1111 = vmatpush1.bf16.msra.mxu0 0
    %1112 = vmatprep.subr.bf16.mxu0 0
    %1113 = vmatpush1.bf16.msra.mxu0 0
    %1114 = vmatprep.mubr.bf16.mxu0 0
    %1115 = vmatmul.mubr.bf16.gmra.mrb[0].mxu0 %v1065
    %v1116 = vpop.f32.mrb[0].mxu0
    %v1117 = vadd.f32 %v1068, %v1116
    %v1118 = vpop.f32.mrb[0].mxu0
    %v1119 = vadd.f32 %v1071, %v1118
    %v1120 = vpop.f32.mrb[0].mxu0
    %v1121 = vpop.f32.mrb[0].mxu0
    %1122 = vdwg.mxu0
    %1123 = vmatprep.subr.bf16.mxu0 %v324
    %1124 = vmatpush1.bf16.msra.mxu0 %v323
    %1125 = vmatprep.subr.bf16.mxu0 %v328
    %1126 = vmatpush1.bf16.msra.mxu0 %v327
    %1127 = vmatprep.subr.bf16.mxu0 %v332
    %1128 = vmatpush1.bf16.msra.mxu0 %v331
    %1129 = vmatprep.subr.bf16.mxu0 %v336
    %1130 = vmatpush1.bf16.msra.mxu0 %v335
    %1131 = vmatprep.subr.bf16.mxu0 %v340
    %1132 = vmatpush1.bf16.msra.mxu0 %v339
    %1133 = vmatprep.subr.bf16.mxu0 %v344
    %1134 = vmatpush1.bf16.msra.mxu0 %v343
    %1135 = vmatprep.subr.bf16.mxu0 %v348
    %1136 = vmatpush1.bf16.msra.mxu0 %v347
    %1137 = vmatprep.subr.bf16.mxu0 %v352
    %1138 = vmatpush1.bf16.msra.mxu0 %v351
    %1139 = vmatprep.subr.bf16.mxu0 0
    %1140 = vmatpush1.bf16.msra.mxu0 0
    %1141 = vmatprep.subr.bf16.mxu0 0
    %1142 = vmatpush1.bf16.msra.mxu0 0
    %1143 = vmatprep.subr.bf16.mxu0 0
    %1144 = vmatpush1.bf16.msra.mxu0 0
    %1145 = vmatprep.subr.bf16.mxu0 0
    %1146 = vmatpush1.bf16.msra.mxu0 0
    %1147 = vmatprep.subr.bf16.mxu0 0
    %1148 = vmatpush1.bf16.msra.mxu0 0
    %1149 = vmatprep.subr.bf16.mxu0 0
    %1150 = vmatpush1.bf16.msra.mxu0 0
    %1151 = vmatprep.subr.bf16.mxu0 0
    %1152 = vmatpush1.bf16.msra.mxu0 0
    %1153 = vmatprep.subr.bf16.mxu0 0
    %1154 = vmatpush1.bf16.msra.mxu0 0
    %1155 = vmatprep.mubr.bf16.mxu0 0
    %1156 = vmatmul.mubr.bf16.gmra.mrb[0].mxu0 %v1065
    %v1157 = vpop.f32.mrb[0].mxu0
    %v1158 = vadd.f32 %v1074, %v1157
    %v1159 = vpop.f32.mrb[0].mxu0
    %v1160 = vadd.f32 %v1077, %v1159
    %v1161 = vpop.f32.mrb[0].mxu0
    %v1162 = vpop.f32.mrb[0].mxu0
    %1163 = vdwg.mxu0
    %v1164 = vxor.u32 %v1117, 2147483648
    %v1165 = vxor.u32 %v1119, 2147483648
    %v1166 = vxor.u32 %v1158, 2147483648
    %v1167 = vxor.u32 %v1160, 2147483648
    %v1168 = vmul.f32 %v1164, 1.442695
    %v1169 = vpow.pop %v1168
    %v1170 = vmul.f32 %v1165, 1.442695
    %v1171 = vpow.pop %v1170
    %v1172 = vmul.f32 %v1166, 1.442695
    %v1173 = vpow.pop %v1172
    %v1174 = vmul.f32 %v1167, 1.442695
    %v1175 = vpow.pop %v1174
    %v1176 = vadd.f32 %v1169, 1.0
    %v1177 = vadd.f32 %v1171, 1.0
    %v1178 = vadd.f32 %v1173, 1.0
    %v1179 = vadd.f32 %v1175, 1.0
    %v1180 = vrcp.pop %v1176
    %v1181 = vmul.f32 1.0, %v1180
    %v1182 = vrcp.pop %v1177
    %v1183 = vmul.f32 1.0, %v1182
    %v1184 = vrcp.pop %v1178
    %v1185 = vmul.f32 1.0, %v1184
    %v1186 = vrcp.pop %v1179
    %v1187 = vmul.f32 1.0, %v1186
    %v1188 = vmul.f32 %v1187, 2.0
    %v1189 = vsub.f32 %v1188, 1.0
    %v1190 = vmul.f32 %v1185, %v1032
    %1192 = vrot.lane.b32.xlu0 %v1189, 64
    %v1193 = vpop.permute.xlu0 %1192
    %v1195 = vmul.f32 %v1185, %v1193
    %1197 = vrot.lane.b32.xlu0 %v1195, 64
    %v1198 = vpop.permute.xlu0 %1197
    %v1200 = vadd.f32 %v1190, %v1198
    %v1201 = vtanh.pop %v1200
    %1203 = vrot.lane.b32.xlu0 %v1201, 64
    %v1204 = vpop.permute.xlu0 %1203
    %v1206 = vmul.f32 %v1187, %v1204
    %1208 = vrot.lane.b32.xlu0 %v1206, 64
    %v1209 = vpop.permute.xlu0 %1208
    %1211 = vst.msk [vmem:[#allocation2] sm:$0x3] %vm221, %v1209
    %v1212 = vmul.f32 %v1183, 2.0
    %v1213 = vsub.f32 %v1212, 1.0
    %v1214 = vmul.f32 %v1181, %v1056
    %1216 = vrot.lane.b32.xlu0 %v1213, 64
    %v1217 = vpop.permute.xlu0 %1216
    %v1219 = vmul.f32 %v1181, %v1217
    %1221 = vrot.lane.b32.xlu0 %v1219, 64
    %v1222 = vpop.permute.xlu0 %1221
    %v1224 = vadd.f32 %v1214, %v1222
    %v1225 = vtanh.pop %v1224
    %1227 = vrot.lane.b32.xlu0 %v1225, 64
    %v1228 = vpop.permute.xlu0 %1227
    %v1230 = vmul.f32 %v1183, %v1228
    %1231 = vst.msk [vmem:[#allocation2] sm:$0x3] %vm219, %v1230
    %v1232 = vld [vmem:[#allocation2] sm:$0x3]
    %v1233 = vpack.c.bf16 %v1232, %v1232
    %v1234 = vrot.slane %v143, 6
    %v1235 = vrot.slane %v147, 5
    %v1236 = vsel %vm216, %v1235, %v1234
    %v1237 = vrot.slane %v144, 6
    %v1238 = vrot.slane %v148, 5
    %v1239 = vsel %vm216, %v1238, %v1237
    %v1240 = vrot.slane %v145, 6
    %v1241 = vrot.slane %v149, 5
    %v1242 = vsel %vm216, %v1241, %v1240
    %v1243 = vrot.slane %v146, 6
    %v1244 = vrot.slane %v150, 5
    %v1245 = vsel %vm216, %v1244, %v1243
    %1250 = vmatprep.subr.bf16.mxu0 %v322
    %1251 = vmatpush1.bf16.msra.mxu0 %v321
    %1252 = vmatprep.subr.bf16.mxu0 %v326
    %1253 = vmatpush1.bf16.msra.mxu0 %v325
    %1254 = vmatprep.subr.bf16.mxu0 %v330
    %1255 = vmatpush1.bf16.msra.mxu0 %v329
    %1256 = vmatprep.subr.bf16.mxu0 %v334
    %1257 = vmatpush1.bf16.msra.mxu0 %v333
    %1258 = vmatprep.subr.bf16.mxu0 %v338
    %1259 = vmatpush1.bf16.msra.mxu0 %v337
    %1260 = vmatprep.subr.bf16.mxu0 %v342
    %1261 = vmatpush1.bf16.msra.mxu0 %v341
    %1262 = vmatprep.subr.bf16.mxu0 %v346
    %1263 = vmatpush1.bf16.msra.mxu0 %v345
    %1264 = vmatprep.subr.bf16.mxu0 %v350
    %1265 = vmatpush1.bf16.msra.mxu0 %v349
    %1266 = vmatprep.subr.bf16.mxu0 0
    %1267 = vmatpush1.bf16.msra.mxu0 0
    %1268 = vmatprep.subr.bf16.mxu0 0
    %1269 = vmatpush1.bf16.msra.mxu0 0
    %1270 = vmatprep.subr.bf16.mxu0 0
    %1271 = vmatpush1.bf16.msra.mxu0 0
    %1272 = vmatprep.subr.bf16.mxu0 0
    %1273 = vmatpush1.bf16.msra.mxu0 0
    %1274 = vmatprep.subr.bf16.mxu0 0
    %1275 = vmatpush1.bf16.msra.mxu0 0
    %1276 = vmatprep.subr.bf16.mxu0 0
    %1277 = vmatpush1.bf16.msra.mxu0 0
    %1278 = vmatprep.subr.bf16.mxu0 0
    %1279 = vmatpush1.bf16.msra.mxu0 0
    %1280 = vmatprep.subr.bf16.mxu0 0
    %1281 = vmatpush1.bf16.msra.mxu0 0
    %1282 = vmatprep.mubr.bf16.mxu0 0
    %1283 = vmatmul.mubr.bf16.gmra.mrb[0].mxu0 %v1233
    %v1284 = vpop.f32.mrb[0].mxu0
    %v1285 = vadd.f32 %v1236, %v1284
    %v1286 = vpop.f32.mrb[0].mxu0
    %v1287 = vadd.f32 %v1239, %v1286
    %v1288 = vpop.f32.mrb[0].mxu0
    %v1289 = vpop.f32.mrb[0].mxu0
    %1290 = vdwg.mxu0
    %1291 = vmatprep.subr.bf16.mxu0 %v324
    %1292 = vmatpush1.bf16.msra.mxu0 %v323
    %1293 = vmatprep.subr.bf16.mxu0 %v328
    %1294 = vmatpush1.bf16.msra.mxu0 %v327
    %1295 = vmatprep.subr.bf16.mxu0 %v332
    %1296 = vmatpush1.bf16.msra.mxu0 %v331
    %1297 = vmatprep.subr.bf16.mxu0 %v336
    %1298 = vmatpush1.bf16.msra.mxu0 %v335
    %1299 = vmatprep.subr.bf16.mxu0 %v340
    %1300 = vmatpush1.bf16.msra.mxu0 %v339
    %1301 = vmatprep.subr.bf16.mxu0 %v344
    %1302 = vmatpush1.bf16.msra.mxu0 %v343
    %1303 = vmatprep.subr.bf16.mxu0 %v348
    %1304 = vmatpush1.bf16.msra.mxu0 %v347
    %1305 = vmatprep.subr.bf16.mxu0 %v352
    %1306 = vmatpush1.bf16.msra.mxu0 %v351
    %1307 = vmatprep.subr.bf16.mxu0 0
    %1308 = vmatpush1.bf16.msra.mxu0 0
    %1309 = vmatprep.subr.bf16.mxu0 0
    %1310 = vmatpush1.bf16.msra.mxu0 0
    %1311 = vmatprep.subr.bf16.mxu0 0
    %1312 = vmatpush1.bf16.msra.mxu0 0
    %1313 = vmatprep.subr.bf16.mxu0 0
    %1314 = vmatpush1.bf16.msra.mxu0 0
    %1315 = vmatprep.subr.bf16.mxu0 0
    %1316 = vmatpush1.bf16.msra.mxu0 0
    %1317 = vmatprep.subr.bf16.mxu0 0
    %1318 = vmatpush1.bf16.msra.mxu0 0
    %1319 = vmatprep.subr.bf16.mxu0 0
    %1320 = vmatpush1.bf16.msra.mxu0 0
    %1321 = vmatprep.subr.bf16.mxu0 0
    %1322 = vmatpush1.bf16.msra.mxu0 0
    %1323 = vmatprep.mubr.bf16.mxu0 0
    %1324 = vmatmul.mubr.bf16.gmra.mrb[0].mxu0 %v1233
    %v1325 = vpop.f32.mrb[0].mxu0
    %v1326 = vadd.f32 %v1242, %v1325
    %v1327 = vpop.f32.mrb[0].mxu0
    %v1328 = vadd.f32 %v1245, %v1327
    %v1329 = vpop.f32.mrb[0].mxu0
    %v1330 = vpop.f32.mrb[0].mxu0
    %1331 = vdwg.mxu0
    %v1332 = vxor.u32 %v1285, 2147483648
    %v1333 = vxor.u32 %v1287, 2147483648
    %v1334 = vxor.u32 %v1326, 2147483648
    %v1335 = vxor.u32 %v1328, 2147483648
    %v1336 = vmul.f32 %v1332, 1.442695
    %v1337 = vpow.pop %v1336
    %v1338 = vmul.f32 %v1333, 1.442695
    %v1339 = vpow.pop %v1338
    %v1340 = vmul.f32 %v1334, 1.442695
    %v1341 = vpow.pop %v1340
    %v1342 = vmul.f32 %v1335, 1.442695
    %v1343 = vpow.pop %v1342
    %v1344 = vadd.f32 %v1337, 1.0
    %v1345 = vadd.f32 %v1339, 1.0
    %v1346 = vadd.f32 %v1341, 1.0
    %v1347 = vadd.f32 %v1343, 1.0
    %v1348 = vrcp.pop %v1344
    %v1349 = vmul.f32 1.0, %v1348
    %v1350 = vrcp.pop %v1345
    %v1351 = vmul.f32 1.0, %v1350
    %v1352 = vrcp.pop %v1346
    %v1353 = vmul.f32 1.0, %v1352
    %v1354 = vrcp.pop %v1347
    %v1355 = vmul.f32 1.0, %v1354
    %v1356 = vmul.f32 %v1355, 2.0
    %v1357 = vsub.f32 %v1356, 1.0
    %v1358 = vmul.f32 %v1353, %v1200
    %1360 = vrot.lane.b32.xlu0 %v1357, 64
    %v1361 = vpop.permute.xlu0 %1360
    %v1363 = vmul.f32 %v1353, %v1361
    %1365 = vrot.lane.b32.xlu0 %v1363, 64
    %v1366 = vpop.permute.xlu0 %1365
    %v1368 = vadd.f32 %v1358, %v1366
    %v1369 = vtanh.pop %v1368
    %1371 = vrot.lane.b32.xlu0 %v1369, 64
    %v1372 = vpop.permute.xlu0 %1371
    %v1374 = vmul.f32 %v1355, %v1372
    %1376 = vrot.lane.b32.xlu0 %v1374, 64
    %v1377 = vpop.permute.xlu0 %1376
    %1379 = vst.msk [vmem:[#allocation2] sm:$0x3] %vm221, %v1377
    %v1380 = vmul.f32 %v1351, 2.0
    %v1381 = vsub.f32 %v1380, 1.0
    %v1382 = vmul.f32 %v1349, %v1224
    %1384 = vrot.lane.b32.xlu0 %v1381, 64
    %v1385 = vpop.permute.xlu0 %1384
    %v1387 = vmul.f32 %v1349, %v1385
    %1389 = vrot.lane.b32.xlu0 %v1387, 64
    %v1390 = vpop.permute.xlu0 %1389
    %v1392 = vadd.f32 %v1382, %v1390
    %v1393 = vtanh.pop %v1392
    %1395 = vrot.lane.b32.xlu0 %v1393, 64
    %v1396 = vpop.permute.xlu0 %1395
    %v1398 = vmul.f32 %v1351, %v1396
    %1399 = vst.msk [vmem:[#allocation2] sm:$0x3] %vm219, %v1398
    %v1400 = vld [vmem:[#allocation2] sm:$0x3]
    %v1401 = vpack.c.bf16 %v1400, %v1400
    %v1402 = vrot.slane %v143, 7
    %v1403 = vrot.slane %v147, 6
    %v1404 = vsel %vm216, %v1403, %v1402
    %v1405 = vrot.slane %v144, 7
    %v1406 = vrot.slane %v148, 6
    %v1407 = vsel %vm216, %v1406, %v1405
    %v1408 = vrot.slane %v145, 7
    %v1409 = vrot.slane %v149, 6
    %v1410 = vsel %vm216, %v1409, %v1408
    %v1411 = vrot.slane %v146, 7
    %v1412 = vrot.slane %v150, 6
    %v1413 = vsel %vm216, %v1412, %v1411
    %1418 = vmatprep.subr.bf16.mxu0 %v322
    %1419 = vmatpush1.bf16.msra.mxu0 %v321
    %1420 = vmatprep.subr.bf16.mxu0 %v326
    %1421 = vmatpush1.bf16.msra.mxu0 %v325
    %1422 = vmatprep.subr.bf16.mxu0 %v330
    %1423 = vmatpush1.bf16.msra.mxu0 %v329
    %1424 = vmatprep.subr.bf16.mxu0 %v334
    %1425 = vmatpush1.bf16.msra.mxu0 %v333
    %1426 = vmatprep.subr.bf16.mxu0 %v338
    %1427 = vmatpush1.bf16.msra.mxu0 %v337
    %1428 = vmatprep.subr.bf16.mxu0 %v342
    %1429 = vmatpush1.bf16.msra.mxu0 %v341
    %1430 = vmatprep.subr.bf16.mxu0 %v346
    %1431 = vmatpush1.bf16.msra.mxu0 %v345
    %1432 = vmatprep.subr.bf16.mxu0 %v350
    %1433 = vmatpush1.bf16.msra.mxu0 %v349
    %1434 = vmatprep.subr.bf16.mxu0 0
    %1435 = vmatpush1.bf16.msra.mxu0 0
    %1436 = vmatprep.subr.bf16.mxu0 0
    %1437 = vmatpush1.bf16.msra.mxu0 0
    %1438 = vmatprep.subr.bf16.mxu0 0
    %1439 = vmatpush1.bf16.msra.mxu0 0
    %1440 = vmatprep.subr.bf16.mxu0 0
    %1441 = vmatpush1.bf16.msra.mxu0 0
    %1442 = vmatprep.subr.bf16.mxu0 0
    %1443 = vmatpush1.bf16.msra.mxu0 0
    %1444 = vmatprep.subr.bf16.mxu0 0
    %1445 = vmatpush1.bf16.msra.mxu0 0
    %1446 = vmatprep.subr.bf16.mxu0 0
    %1447 = vmatpush1.bf16.msra.mxu0 0
    %1448 = vmatprep.subr.bf16.mxu0 0
    %1449 = vmatpush1.bf16.msra.mxu0 0
    %1450 = vmatprep.mubr.bf16.mxu0 0
    %1451 = vmatmul.mubr.bf16.gmra.mrb[0].mxu0 %v1401
    %v1452 = vpop.f32.mrb[0].mxu0
    %v1453 = vadd.f32 %v1404, %v1452
    %v1454 = vpop.f32.mrb[0].mxu0
    %v1455 = vadd.f32 %v1407, %v1454
    %v1456 = vpop.f32.mrb[0].mxu0
    %v1457 = vpop.f32.mrb[0].mxu0
    %1458 = vdwg.mxu0
    %1459 = vmatprep.subr.bf16.mxu0 %v324
    %1460 = vmatpush1.bf16.msra.mxu0 %v323
    %1461 = vmatprep.subr.bf16.mxu0 %v328
    %1462 = vmatpush1.bf16.msra.mxu0 %v327
    %1463 = vmatprep.subr.bf16.mxu0 %v332
    %1464 = vmatpush1.bf16.msra.mxu0 %v331
    %1465 = vmatprep.subr.bf16.mxu0 %v336
    %1466 = vmatpush1.bf16.msra.mxu0 %v335
    %1467 = vmatprep.subr.bf16.mxu0 %v340
    %1468 = vmatpush1.bf16.msra.mxu0 %v339
    %1469 = vmatprep.subr.bf16.mxu0 %v344
    %1470 = vmatpush1.bf16.msra.mxu0 %v343
    %1471 = vmatprep.subr.bf16.mxu0 %v348
    %1472 = vmatpush1.bf16.msra.mxu0 %v347
    %1473 = vmatprep.subr.bf16.mxu0 %v352
    %1474 = vmatpush1.bf16.msra.mxu0 %v351
    %1475 = vmatprep.subr.bf16.mxu0 0
    %1476 = vmatpush1.bf16.msra.mxu0 0
    %1477 = vmatprep.subr.bf16.mxu0 0
    %1478 = vmatpush1.bf16.msra.mxu0 0
    %1479 = vmatprep.subr.bf16.mxu0 0
    %1480 = vmatpush1.bf16.msra.mxu0 0
    %1481 = vmatprep.subr.bf16.mxu0 0
    %1482 = vmatpush1.bf16.msra.mxu0 0
    %1483 = vmatprep.subr.bf16.mxu0 0
    %1484 = vmatpush1.bf16.msra.mxu0 0
    %1485 = vmatprep.subr.bf16.mxu0 0
    %1486 = vmatpush1.bf16.msra.mxu0 0
    %1487 = vmatprep.subr.bf16.mxu0 0
    %1488 = vmatpush1.bf16.msra.mxu0 0
    %1489 = vmatprep.subr.bf16.mxu0 0
    %1490 = vmatpush1.bf16.msra.mxu0 0
    %1491 = vmatprep.mubr.bf16.mxu0 0
    %1492 = vmatmul.mubr.bf16.gmra.mrb[0].mxu0 %v1401
    %v1493 = vpop.f32.mrb[0].mxu0
    %v1494 = vadd.f32 %v1410, %v1493
    %v1495 = vpop.f32.mrb[0].mxu0
    %v1496 = vadd.f32 %v1413, %v1495
    %v1497 = vpop.f32.mrb[0].mxu0
    %v1498 = vpop.f32.mrb[0].mxu0
    %1499 = vdwg.mxu0
    %v1500 = vxor.u32 %v1453, 2147483648
    %v1501 = vxor.u32 %v1455, 2147483648
    %v1502 = vxor.u32 %v1494, 2147483648
    %v1503 = vxor.u32 %v1496, 2147483648
    %v1504 = vmul.f32 %v1500, 1.442695
    %v1505 = vpow.pop %v1504
    %v1506 = vmul.f32 %v1501, 1.442695
    %v1507 = vpow.pop %v1506
    %v1508 = vmul.f32 %v1502, 1.442695
    %v1509 = vpow.pop %v1508
    %v1510 = vmul.f32 %v1503, 1.442695
    %v1511 = vpow.pop %v1510
    %v1512 = vadd.f32 %v1505, 1.0
    %v1513 = vadd.f32 %v1507, 1.0
    %v1514 = vadd.f32 %v1509, 1.0
    %v1515 = vadd.f32 %v1511, 1.0
    %v1516 = vrcp.pop %v1512
    %v1517 = vmul.f32 1.0, %v1516
    %v1518 = vrcp.pop %v1513
    %v1519 = vmul.f32 1.0, %v1518
    %v1520 = vrcp.pop %v1514
    %v1521 = vmul.f32 1.0, %v1520
    %v1522 = vrcp.pop %v1515
    %v1523 = vmul.f32 1.0, %v1522
    %v1524 = vmul.f32 %v1523, 2.0
    %v1525 = vsub.f32 %v1524, 1.0
    %v1526 = vmul.f32 %v1521, %v1368
    %1528 = vrot.lane.b32.xlu0 %v1525, 64
    %v1529 = vpop.permute.xlu0 %1528
    %v1531 = vmul.f32 %v1521, %v1529
    %1533 = vrot.lane.b32.xlu0 %v1531, 64
    %v1534 = vpop.permute.xlu0 %1533
    %v1536 = vadd.f32 %v1526, %v1534
    %v1537 = vtanh.pop %v1536
    %1539 = vrot.lane.b32.xlu0 %v1537, 64
    %v1540 = vpop.permute.xlu0 %1539
    %v1542 = vmul.f32 %v1523, %v1540
    %1544 = vrot.lane.b32.xlu0 %v1542, 64
    %v1545 = vpop.permute.xlu0 %1544
    %1547 = vst.msk [vmem:[#allocation2] sm:$0x3] %vm221, %v1545
    %v1548 = vmul.f32 %v1519, 2.0
    %v1549 = vsub.f32 %v1548, 1.0
    %v1550 = vmul.f32 %v1517, %v1392
    %1552 = vrot.lane.b32.xlu0 %v1549, 64
    %v1553 = vpop.permute.xlu0 %1552
    %v1555 = vmul.f32 %v1517, %v1553
    %1557 = vrot.lane.b32.xlu0 %v1555, 64
    %v1558 = vpop.permute.xlu0 %1557
    %v1560 = vadd.f32 %v1550, %v1558
    %v1561 = vtanh.pop %v1560
    %1563 = vrot.lane.b32.xlu0 %v1561, 64
    %v1564 = vpop.permute.xlu0 %1563
    %v1566 = vmul.f32 %v1519, %v1564
    %1567 = vst.msk [vmem:[#allocation2] sm:$0x3] %vm219, %v1566
    %v1568 = vld [vmem:[#allocation2] sm:$0x3]
    %v1569 = vpack.c.bf16 %v1568, %v1568
    %1570 = vmatprep.subr.bf16.mxu0 %v324
    %1571 = vmatpush1.bf16.msra.mxu0 %v323
    %1572 = vmatprep.subr.bf16.mxu0 %v328
    %1573 = vmatpush1.bf16.msra.mxu0 %v327
    %1574 = vmatprep.subr.bf16.mxu0 %v332
    %1575 = vmatpush1.bf16.msra.mxu0 %v331
    %1576 = vmatprep.subr.bf16.mxu0 %v336
    %1577 = vmatpush1.bf16.msra.mxu0 %v335
    %1578 = vmatprep.subr.bf16.mxu0 %v340
    %1579 = vmatpush1.bf16.msra.mxu0 %v339
    %1580 = vmatprep.subr.bf16.mxu0 %v344
    %1581 = vmatpush1.bf16.msra.mxu0 %v343
    %1582 = vmatprep.subr.bf16.mxu0 %v348
    %1583 = vmatpush1.bf16.msra.mxu0 %v347
    %1584 = vmatprep.subr.bf16.mxu0 %v352
    %1585 = vmatpush1.bf16.msra.mxu0 %v351
    %1586 = vmatprep.subr.bf16.mxu0 0
    %1587 = vmatpush1.bf16.msra.mxu0 0
    %1588 = vmatprep.subr.bf16.mxu0 0
    %1589 = vmatpush1.bf16.msra.mxu0 0
    %1590 = vmatprep.subr.bf16.mxu0 0
    %1591 = vmatpush1.bf16.msra.mxu0 0
    %1592 = vmatprep.subr.bf16.mxu0 0
    %1593 = vmatpush1.bf16.msra.mxu0 0
    %1594 = vmatprep.subr.bf16.mxu0 0
    %1595 = vmatpush1.bf16.msra.mxu0 0
    %1596 = vmatprep.subr.bf16.mxu0 0
    %1597 = vmatpush1.bf16.msra.mxu0 0
    %1598 = vmatprep.subr.bf16.mxu0 0
    %1599 = vmatpush1.bf16.msra.mxu0 0
    %1600 = vmatprep.subr.bf16.mxu0 0
    %1601 = vmatpush1.bf16.msra.mxu0 0
    %1602 = vmatprep.mubr.bf16.mxu0 0
    %1603 = vmatmul.mubr.bf16.gmra.mrb[0].mxu0 %v1569
    %v1604 = vpop.f32.mrb[0].mxu0
    %v1605 = vadd.f32 0.0, %v1604
    %v1606 = vpop.f32.mrb[0].mxu0
    %v1607 = vadd.f32 0.0, %v1606
    %v1608 = vpop.f32.mrb[0].mxu0
    %v1609 = vpop.f32.mrb[0].mxu0
    %1610 = vdwg.mxu0
    %v1611 = vrot.slane %v149, 7
    %v1612 = vsel %vm216, %v1611, %v145
    %v1613 = vrot.slane %v150, 7
    %v1614 = vsel %vm216, %v1613, %v146
    %v1617 = vadd.f32 %v1605, %v1612
    %v1618 = vadd.f32 %v1607, %v1614
    %v1619 = vxor.u32 %v1617, 2147483648
    %v1620 = vxor.u32 %v1618, 2147483648
    %v1621 = vmul.f32 %v1619, 1.442695
    %v1622 = vpow.pop %v1621
    %v1623 = vmul.f32 %v1620, 1.442695
    %v1624 = vpow.pop %v1623
    %v1625 = vadd.f32 %v1622, 1.0
    %v1626 = vadd.f32 %v1624, 1.0
    %v1627 = vrcp.pop %v1625
    %v1628 = vmul.f32 1.0, %v1627
    %v1629 = vrcp.pop %v1626
    %v1630 = vmul.f32 1.0, %v1629
    %v1631 = vmul.f32 %v1630, 2.0
    %v1632 = vsub.f32 %v1631, 1.0
    %v1633 = vmul.f32 %v1628, %v1536
    %1635 = vrot.lane.b32.xlu0 %v1632, 64
    %v1636 = vpop.permute.xlu0 %1635
    %v1638 = vmul.f32 %v1628, %v1636
    %1640 = vrot.lane.b32.xlu0 %v1638, 64
    %v1641 = vpop.permute.xlu0 %1640
    %v1643 = vadd.f32 %v1633, %v1641
    %v1644 = vtanh.pop %v1643
    %1646 = vrot.lane.b32.xlu0 %v1644, 64
    %v1647 = vpop.permute.xlu0 %1646
    %v1649 = vmul.f32 %v1630, %v1647
    %v1650 = vpack.c.bf16 %v1649, %v1649
    %v1651 = vld [vmem:[%s5] sm:$0x1]
    %v1653 = vlaneseq
    %v1654 = vshrl.u32 %v1653, 7
    %v1655 = vsub.s32 0, %v1654
    %v1656 = vrot.slane %v1651, %v1655
    %v1666 = vunpack.c.l.b16 %v71
    %v1667 = vunpack.c.l.b16 %v72
    %v1668 = vunpack.c.l.b16 %v73
    %v1669 = vunpack.c.l.b16 %v74
    %v1670 = vunpack.c.l.b16 %v75
    %v1671 = vunpack.c.l.b16 %v76
    %v1672 = vunpack.c.l.b16 %v77
    %v1673 = vunpack.c.l.b16 %v78
    %v1674 = vpack.c.b16 %v1667, %v1666
    %v1675 = vpack.c.b16 %v1669, %v1668
    %v1676 = vpack.c.b16 %v1671, %v1670
    %v1677 = vpack.c.b16 %v1673, %v1672
    %vm1682 = vcmask 523264
    %v1684 = vsel %vm1682, %v1650, 0
    %1686 = vmatprep.subr.bf16.mxu0 0
    %1687 = vmatpush1.bf16.msra.mxu0 %v1674
    %1688 = vmatprep.subr.bf16.mxu0 0
    %1689 = vmatpush1.bf16.msra.mxu0 %v1675
    %1690 = vmatprep.subr.bf16.mxu0 0
    %1691 = vmatpush1.bf16.msra.mxu0 %v1676
    %1692 = vmatprep.subr.bf16.mxu0 0
    %1693 = vmatpush1.bf16.msra.mxu0 %v1677
    %1694 = vmatprep.subr.bf16.mxu0 0
    %1695 = vmatpush1.bf16.msra.mxu0 0
    %1696 = vmatprep.subr.bf16.mxu0 0
    %1697 = vmatpush1.bf16.msra.mxu0 0
    %1698 = vmatprep.subr.bf16.mxu0 0
    %1699 = vmatpush1.bf16.msra.mxu0 0
    %1700 = vmatprep.subr.bf16.mxu0 0
    %1701 = vmatpush1.bf16.msra.mxu0 0
    %1702 = vmatprep.subr.bf16.mxu0 0
    %1703 = vmatpush1.bf16.msra.mxu0 0
    %1704 = vmatprep.subr.bf16.mxu0 0
    %1705 = vmatpush1.bf16.msra.mxu0 0
    %1706 = vmatprep.subr.bf16.mxu0 0
    %1707 = vmatpush1.bf16.msra.mxu0 0
    %1708 = vmatprep.subr.bf16.mxu0 0
    %1709 = vmatpush1.bf16.msra.mxu0 0
    %1710 = vmatprep.subr.bf16.mxu0 0
    %1711 = vmatpush1.bf16.msra.mxu0 0
    %1712 = vmatprep.subr.bf16.mxu0 0
    %1713 = vmatpush1.bf16.msra.mxu0 0
    %1714 = vmatprep.subr.bf16.mxu0 0
    %1715 = vmatpush1.bf16.msra.mxu0 0
    %1716 = vmatprep.subr.bf16.mxu0 0
    %1717 = vmatpush1.bf16.msra.mxu0 0
    %1718 = vmatprep.mubr.bf16.mxu0 0
    %1719 = vmatmul.mubr.bf16.gmra.mrb[0].mxu0 %v1684
    %v1720 = vpop.f32.mrb[0].mxu0
    %v1721 = vadd.f32 %v1656, %v1720
    %v1722 = vpop.f32.mrb[0].mxu0
    %v1723 = vpop.f32.mrb[0].mxu0
    %v1724 = vpop.f32.mrb[0].mxu0
    %1725 = vdwg.mxu0
    %vm1726 = vcmask 9216
    %1727 = vst.msk [vmem:[#allocation6] sm:$0x3] %vm1726, %v1721
    // Predicated region
    $region30: #{tpu_custom_call.1} parent=1 // pred_check
      _
    $region31: #{tpu_custom_call.1} parent=1 // pred_check_branch
      %1729 = sbr.rel (0) target = $region33
    $region32: #{tpu_custom_call.1} parent=1 // pred_region
      %s1731 = ssub.s32 32, 32
      %1732 = vsyncadd [#allocation5], %s1731
      %s1734 = sshll.u32 [#allocation6], 4
      %s1735 = int_to_ptr.vmem [resolvable:$true] %s1734
      %1737 = dma.vmem_to_hbm [thread:$0]  %s1735, 32, %s6, [#allocation5]
    $region33: #{tpu_custom_call.1} parent=1 // pred_fallthru
      _
    // Predicated region
    $region34: #{tpu_custom_call.1} parent=1 // pred_check
      _
    $region35: #{tpu_custom_call.1} parent=1 // pred_check_branch
      %1739 = sbr.rel (0) target = $region37
    $region36: #{tpu_custom_call.1} parent=1 // pred_region
      %1740 = dma.done [#allocation5], 32
    $region37: #{tpu_custom_call.1} parent=1 // pred_fallthru
      _
    %1741 = vsyncpa [#allocation4], 1
    %1742 = vsyncpa [#allocation5], 1

</llo_original>
